<compile_context>
chip_gen: v6e
topology: v6e:2x2x1
jax: 0.10.0
libtpu: 0.0.40
codegen_flags: <defaults>
</compile_context>

<pallas_src>
import functools

import jax
import jax.numpy as jnp
from jax.experimental import pallas as pl
from jax.experimental.pallas import tpu as pltpu


# ----------------------------------------------------------------------------
# Pallas kernel: fully fused (fwd + bwd + combining) LSTM + final linear.
# ----------------------------------------------------------------------------
def bilstm_kernel(emb2_ref, w_in_ref, bias_ref, w_rec_ref,
                  wlin_ref, blin_ref, st0_ref, cst0_ref, mdir_ref,
                  out_ref, *, seq_len, batch, hidden):
    H = hidden
    G4 = 4 * H            # one gate block = [comb 2H | fwd H | bwd H] = 128 lanes

    # ---- Prologue (off the recurrent critical path):
    # one matmul gives, for every step t, the fwd input projection at time t,
    # the bwd input projection at time T-1-t, and every bias, already summed
    # and laid out in the fused gate-column order.  Row block t = rows
    # [t*B, (t+1)*B).  Combining-cell columns hold just b_c (time-invariant).
    pre2d = (jnp.dot(emb2_ref[...], w_in_ref[...],
                     preferred_element_type=jnp.float32)
             + bias_ref[...])                              # (seq*B, 16H)

    w_rec = w_rec_ref[...]                                 # (4H, 16H)
    mdir = mdir_ref[...]                                   # (1, 4H) 0=comb,1=dir

    st = st0_ref[...]                                      # (B, 4H) [hc|hf|hb]
    c_st = cst0_ref[...]                                   # (B, 4H) [cc|cf|cb]
    st_init, c_init = st, c_st

    def fused_step(st, c_st, pre_t):
        # One MXU push yields gates for ALL three cells:
        #   comb cols: hc @ Whh_c + [hf|hb] @ Wih_c   (combining step, skewed)
        #   dir  cols: [hf|hb] @ blockdiag(Whh_f, Whh_b)  (fwd+bwd step)
        gates = (jnp.dot(st, w_rec, preferred_element_type=jnp.float32)
                 + pre_t)                                  # (B, 16H)
        sig = jax.nn.sigmoid(gates[:, :3 * G4])            # I,F,O spans only
        i = sig[:, 0 * G4:1 * G4]
        f = sig[:, 1 * G4:2 * G4]
        o = sig[:, 2 * G4:3 * G4]
        g = jnp.tanh(gates[:, 3 * G4:])                    # G span only
        c_new = f * c_st + i * g
        return o * jnp.tanh(c_new), c_new

    # ---- Fused recurrence: iteration t runs directional step t and (for
    # t >= 1) combining step t-1; their gates come from the same dot.
    for t in range(seq_len):
        pre_t = pre2d[t * batch:(t + 1) * batch, :]
        st_n, c_n = fused_step(st, c_st, pre_t)
        if t == 0:
            # Skew boundary: only the directional half is valid at t=0; keep
            # the combining state at its initial value (masked blend, no
            # lane movement, one-time cost).
            st_n = st_init + (st_n - st_init) * mdir
            c_n = c_init + (c_n - c_init) * mdir
        st, c_st = st_n, c_n

    # ---- Epilogue: the final combining step (consumes the last directional
    # hidden).  The directional half rides along for free and is discarded by
    # the zero-padded rows of the linear weight.
    st, _ = fused_step(st, c_st, pre2d[:batch, :])

    # ---- Final linear projection to vocab (padded W so no lane slice needed).
    out_ref[...] = (jnp.dot(st, wlin_ref[...],
                            preferred_element_type=jnp.float32)
                    + blin_ref[...])


# ----------------------------------------------------------------------------
# Wrapper: embedding gather (glue), fused-weight construction, pallas_call.
# ----------------------------------------------------------------------------
# torch LSTMCell gate order is [i f g o]; fused block order is [I F O G] so
# that one contiguous sigmoid span (I,F,O) and one tanh span (G) suffice.
_TORCH_GATE_TO_BLOCK = {0: 0, 1: 1, 2: 3, 3: 2}


def _build_fused_weights(params, hidden):
    """Build the fused (4H,16H) recurrent matrix, (2H,16H) input-projection
    matrix and (1,16H) bias row.  Column layout per gate block (width 4H):
    [comb 2H | fwd H | bwd H]; recurrent rows: [hc 2H | hf H | hb H];
    input rows: [emb_t H | emb_{T-1-t} H]."""
    H = hidden
    G = 16 * H
    w_rec = jnp.zeros((4 * H, G), jnp.float32)
    w_in = jnp.zeros((2 * H, G), jnp.float32)
    bias = jnp.zeros((1, G), jnp.float32)

    whh_c, wih_c, b_c = params["whh_c_t"], params["wih_c_t"], params["b_c"]
    whh_f, wih_f, b_f = params["whh_f_t"], params["wih_f_t"], params["b_f"]
    whh_b, wih_b, b_b = params["whh_b_t"], params["wih_b_t"], params["b_b"]

    for tg in range(4):                       # torch gate index
        blk = _TORCH_GATE_TO_BLOCK[tg]
        c0 = blk * 4 * H
        comb = slice(c0, c0 + 2 * H)
        fwd = slice(c0 + 2 * H, c0 + 3 * H)
        bwd = slice(c0 + 3 * H, c0 + 4 * H)
        c2 = slice(tg * 2 * H, (tg + 1) * 2 * H)
        c1 = slice(tg * H, (tg + 1) * H)

        # Recurrent matrix.
        w_rec = w_rec.at[0:2 * H, comb].set(whh_c[:, c2])          # hc -> comb
        w_rec = w_rec.at[2 * H:3 * H, comb].set(wih_c[0:H, c2])    # hf -> comb
        w_rec = w_rec.at[3 * H:4 * H, comb].set(wih_c[H:2 * H, c2])  # hb -> comb
        w_rec = w_rec.at[2 * H:3 * H, fwd].set(whh_f[:, c1])       # hf -> fwd
        w_rec = w_rec.at[3 * H:4 * H, bwd].set(whh_b[:, c1])       # hb -> bwd

        # Input projection (emb paired with its time-reversed copy).
        w_in = w_in.at[0:H, fwd].set(wih_f[:, c1])
        w_in = w_in.at[H:2 * H, bwd].set(wih_b[:, c1])

        # Fused bias row.
        bias = bias.at[:, comb].set(b_c[:, c2])
        bias = bias.at[:, fwd].set(b_f[:, c1])
        bias = bias.at[:, bwd].set(b_b[:, c1])
    return w_rec, w_in, bias


def domain_generator_forward(tokens, params, *, seq_len, hidden, vocab):
    batch = tokens.shape[0]
    H = hidden

    # Embedding lookup (XLA glue; tiny gather).  torch: out.view(seq, batch,
    # -1) on the (batch, seq, H) gather == raw row-major reshape.
    emb_sbh = jnp.take(params["embedding"], tokens, axis=0).reshape(
        seq_len, batch, H)
    # Pair each step t with its reversed counterpart so ONE prologue matmul
    # yields both the fwd (time t) and bwd (time T-1-t) input projections.
    emb2 = jnp.concatenate([emb_sbh, emb_sbh[::-1]], axis=-1).reshape(
        seq_len * batch, 2 * H)

    # Fused weights / states (in production these are built once at load).
    w_rec, w_in, bias = _build_fused_weights(params, H)
    st0 = jnp.concatenate([params["h0c"], params["h0f"], params["h0b"]], axis=1)
    cst0 = jnp.concatenate([params["c0c"], params["c0f"], params["c0b"]], axis=1)
    mdir = jnp.concatenate([jnp.zeros((1, 2 * H), jnp.float32),
                            jnp.ones((1, 2 * H), jnp.float32)], axis=1)
    wlin_pad = jnp.concatenate(
        [params["wlin_t"], jnp.zeros((2 * H, vocab), jnp.float32)], axis=0)

    kernel = functools.partial(bilstm_kernel, seq_len=seq_len,
                               batch=batch, hidden=H)
    args = (emb2, w_in, bias, w_rec, wlin_pad, params["b_lin"],
            st0, cst0, mdir)

    return pl.pallas_call(
        kernel,
        out_shape=jax.ShapeDtypeStruct((batch, vocab), jnp.float32),
        in_specs=[pl.BlockSpec(memory_space=pltpu.MemorySpace.VMEM)] * len(args),
        out_specs=pl.BlockSpec(memory_space=pltpu.MemorySpace.VMEM),
    )(*args)


# ----------------------------------------------------------------------------
# Pure-JAX reference (original per-step formulation, un-fused weights).
# ----------------------------------------------------------------------------
def reference_forward(tokens, params, *, seq_len, hidden, vocab):
    batch = tokens.shape[0]
    emb = jnp.take(params["embedding"], tokens, axis=0).reshape(
        seq_len, batch, hidden)

    def cell(x, h, c, wih_t, whh_t, b, H):
        g = x @ wih_t + h @ whh_t + b
        i = jax.nn.sigmoid(g[:, :H])
        f = jax.nn.sigmoid(g[:, H:2 * H])
        gg = jnp.tanh(g[:, 2 * H:3 * H])
        o = jax.nn.sigmoid(g[:, 3 * H:])
        c_new = f * c + i * gg
        return o * jnp.tanh(c_new), c_new

    hf, cf = params["h0f"], params["c0f"]
    hb, cb = params["h0b"], params["c0b"]
    hc, cc = params["h0c"], params["c0c"]
    fwd, bwd = [], []
    for t in range(seq_len):
        hf, cf = cell(emb[t], hf, cf, params["wih_f_t"], params["whh_f_t"],
                      params["b_f"], hidden)
        fwd.append(hf)
    for t in reversed(range(seq_len)):
        hb, cb = cell(emb[t], hb, cb, params["wih_b_t"], params["whh_b_t"],
                      params["b_b"], hidden)
        bwd.append(hb)
    for f_, b_ in zip(fwd, bwd):
        x = jnp.concatenate([f_, b_], axis=1)
        hc, cc = cell(x, hc, cc, params["wih_c_t"], params["whh_c_t"],
                      params["b_c"], 2 * hidden)
    return hc @ params["wlin_t"] + params["b_lin"]


# ----------------------------------------------------------------------------
# Deterministic parameter construction (mirrors nn.Module __init__ shapes).
# ----------------------------------------------------------------------------
def make_params(key, *, vocab, hidden, batch):
    keys = jax.random.split(key, 24)
    k = iter(keys)

    def uni(rng, shape, bound):
        return jax.random.uniform(rng, shape, jnp.float32, -bound, bound)

    def lstm_cell_params(ra, rb, rc, rd, in_dim, h_dim):
        bound = 1.0 / jnp.sqrt(h_dim)
        w_ih = uni(ra, (4 * h_dim, in_dim), bound)     # torch layout (4H, in)
        w_hh = uni(rb, (4 * h_dim, h_dim), bound)      # torch layout (4H, H)
        b = uni(rc, (1, 4 * h_dim), bound) + uni(rd, (1, 4 * h_dim), bound)
        return w_ih.T, w_hh.T, b                       # pre-transposed

    # Embedding (vocab, hidden), padding_idx=0 row zeroed.
    emb = jax.random.normal(next(k), (vocab, hidden), jnp.float32)
    emb = emb.at[0].set(0.0)

    wih_f_t, whh_f_t, b_f = lstm_cell_params(next(k), next(k), next(k), next(k),
                                             hidden, hidden)
    wih_b_t, whh_b_t, b_b = lstm_cell_params(next(k), next(k), next(k), next(k),
                                             hidden, hidden)
    wih_c_t, whh_c_t, b_c = lstm_cell_params(next(k), next(k), next(k), next(k),
                                             2 * hidden, 2 * hidden)

    lin_bound = 1.0 / jnp.sqrt(2 * hidden)
    wlin = uni(next(k), (vocab, 2 * hidden), lin_bound)   # torch Linear (out, in)
    b_lin = uni(next(k), (1, vocab), lin_bound)

    # init_hidden: kaiming_normal_ on (batch, H) -> std = sqrt(2 / fan_in).
    def kaiming(rng, shape):
        return jax.random.normal(rng, shape, jnp.float32) * jnp.sqrt(2.0 / shape[1])

    return dict(
        embedding=emb,
        wih_f_t=wih_f_t, whh_f_t=whh_f_t, b_f=b_f,
        wih_b_t=wih_b_t, whh_b_t=whh_b_t, b_b=b_b,
        wih_c_t=wih_c_t, whh_c_t=whh_c_t, b_c=b_c,
        wlin_t=wlin.T, b_lin=b_lin,
        h0f=kaiming(next(k), (batch, hidden)),
        c0f=kaiming(next(k), (batch, hidden)),
        h0b=kaiming(next(k), (batch, hidden)),
        c0b=kaiming(next(k), (batch, hidden)),
        h0c=kaiming(next(k), (batch, 2 * hidden)),
        c0c=kaiming(next(k), (batch, 2 * hidden)),
    )


if __name__ == "__main__":
    # Small shapes implied by the module: args.window = seq, args.hidden_dim = H.
    batch, seq_len, hidden, vocab = 2, 8, 32, 128

    key = jax.random.PRNGKey(0)
    pkey, tkey = jax.random.split(key)
    params = make_params(pkey, vocab=vocab, hidden=hidden, batch=batch)
    tokens = jax.random.randint(tkey, (batch, seq_len), 0, vocab, dtype=jnp.int32)

    out = domain_generator_forward(tokens, params, seq_len=seq_len,
                                   hidden=hidden, vocab=vocab)
    out = jax.block_until_ready(out)

    ref = reference_forward(tokens, params, seq_len=seq_len,
                            hidden=hidden, vocab=vocab)
    assert out.shape == (batch, vocab)
    assert jnp.allclose(out, ref, atol=2e-4, rtol=2e-4), "mismatch vs reference"

    print("KERNEL_OK")
</pallas_src>

<mosaic_0001>
module attributes {stable_mosaic.version = 11 : i64} {
  func.func @bilstm_kernel(%arg0: memref<16x64xf32, #tpu.memory_space<vmem>>, %arg1: memref<64x512xf32, #tpu.memory_space<vmem>>, %arg2: memref<1x512xf32, #tpu.memory_space<vmem>>, %arg3: memref<128x512xf32, #tpu.memory_space<vmem>>, %arg4: memref<128x128xf32, #tpu.memory_space<vmem>>, %arg5: memref<1x128xf32, #tpu.memory_space<vmem>>, %arg6: memref<2x128xf32, #tpu.memory_space<vmem>>, %arg7: memref<2x128xf32, #tpu.memory_space<vmem>>, %arg8: memref<1x128xf32, #tpu.memory_space<vmem>>, %arg9: memref<2x128xf32, #tpu.memory_space<vmem>>) attributes {dimension_semantics = [], scalar_prefetch = 0 : i64, scratch_operands = 0 : i64, tpu.core_type = #tpu.core_type<tc>} {
    %c0 = arith.constant 0 : index
    %c0_0 = arith.constant 0 : index
    %0 = vector.load %arg0[%c0, %c0_0] : memref<16x64xf32, #tpu.memory_space<vmem>>, vector<16x64xf32>
    %c0_1 = arith.constant 0 : index
    %c0_2 = arith.constant 0 : index
    %1 = vector.load %arg1[%c0_1, %c0_2] : memref<64x512xf32, #tpu.memory_space<vmem>>, vector<64x512xf32>
    %cst = arith.constant dense<0.000000e+00> : vector<16x512xf32>
    %2 = tpu.matmul %0, %1, %cst {dimension_numbers = #tpu.dot_dimension_numbers<[1], [0], [0], [1], [0, 0, 1, 1], [], []>} : vector<16x64xf32>, vector<64x512xf32>, vector<16x512xf32> -> vector<16x512xf32>
    %c0_3 = arith.constant 0 : index
    %c0_4 = arith.constant 0 : index
    %3 = vector.load %arg2[%c0_3, %c0_4] : memref<1x512xf32, #tpu.memory_space<vmem>>, vector<1x512xf32>
    %4 = vector.broadcast %3 : vector<1x512xf32> to vector<16x512xf32>
    %5 = arith.addf %2, %4 : vector<16x512xf32>
    %c0_5 = arith.constant 0 : index
    %c0_6 = arith.constant 0 : index
    %6 = vector.load %arg3[%c0_5, %c0_6] : memref<128x512xf32, #tpu.memory_space<vmem>>, vector<128x512xf32>
    %c0_7 = arith.constant 0 : index
    %c0_8 = arith.constant 0 : index
    %7 = vector.load %arg8[%c0_7, %c0_8] : memref<1x128xf32, #tpu.memory_space<vmem>>, vector<1x128xf32>
    %c0_9 = arith.constant 0 : index
    %c0_10 = arith.constant 0 : index
    %8 = vector.load %arg6[%c0_9, %c0_10] : memref<2x128xf32, #tpu.memory_space<vmem>>, vector<2x128xf32>
    %c0_11 = arith.constant 0 : index
    %c0_12 = arith.constant 0 : index
    %9 = vector.load %arg7[%c0_11, %c0_12] : memref<2x128xf32, #tpu.memory_space<vmem>>, vector<2x128xf32>
    %10 = vector.extract_strided_slice %5 {offsets = [0, 0], sizes = [2, 512], strides = [1, 1]} : vector<16x512xf32> to vector<2x512xf32>
    %cst_13 = arith.constant dense<0.000000e+00> : vector<2x512xf32>
    %11 = tpu.matmul %8, %6, %cst_13 {dimension_numbers = #tpu.dot_dimension_numbers<[1], [0], [0], [1], [0, 0, 1, 1], [], []>} : vector<2x128xf32>, vector<128x512xf32>, vector<2x512xf32> -> vector<2x512xf32>
    %12 = arith.addf %11, %10 : vector<2x512xf32>
    %13 = vector.extract_strided_slice %12 {offsets = [0, 0], sizes = [2, 384], strides = [1, 1]} : vector<2x512xf32> to vector<2x384xf32>
    %14 = arith.negf %13 : vector<2x384xf32>
    %15 = math.exp %14 : vector<2x384xf32>
    %cst_14 = arith.constant 1.000000e+00 : f32
    %16 = vector.broadcast %cst_14 : f32 to vector<2x384xf32>
    %17 = arith.addf %16, %15 : vector<2x384xf32>
    %18 = arith.divf %16, %17 : vector<2x384xf32>
    %19 = vector.extract_strided_slice %18 {offsets = [0, 0], sizes = [2, 128], strides = [1, 1]} : vector<2x384xf32> to vector<2x128xf32>
    %20 = vector.extract_strided_slice %18 {offsets = [0, 128], sizes = [2, 128], strides = [1, 1]} : vector<2x384xf32> to vector<2x128xf32>
    %21 = vector.extract_strided_slice %18 {offsets = [0, 256], sizes = [2, 128], strides = [1, 1]} : vector<2x384xf32> to vector<2x128xf32>
    %22 = vector.extract_strided_slice %12 {offsets = [0, 384], sizes = [2, 128], strides = [1, 1]} : vector<2x512xf32> to vector<2x128xf32>
    %23 = math.tanh %22 : vector<2x128xf32>
    %24 = arith.mulf %20, %9 : vector<2x128xf32>
    %25 = arith.mulf %19, %23 : vector<2x128xf32>
    %26 = arith.addf %24, %25 : vector<2x128xf32>
    %27 = math.tanh %26 : vector<2x128xf32>
    %28 = arith.mulf %21, %27 : vector<2x128xf32>
    %29 = arith.subf %28, %8 : vector<2x128xf32>
    %30 = vector.broadcast %7 : vector<1x128xf32> to vector<2x128xf32>
    %31 = arith.mulf %29, %30 : vector<2x128xf32>
    %32 = arith.addf %8, %31 : vector<2x128xf32>
    %33 = arith.subf %26, %9 : vector<2x128xf32>
    %34 = vector.broadcast %7 : vector<1x128xf32> to vector<2x128xf32>
    %35 = arith.mulf %33, %34 : vector<2x128xf32>
    %36 = arith.addf %9, %35 : vector<2x128xf32>
    %37 = vector.extract_strided_slice %5 {offsets = [2, 0], sizes = [2, 512], strides = [1, 1]} : vector<16x512xf32> to vector<2x512xf32>
    %cst_15 = arith.constant dense<0.000000e+00> : vector<2x512xf32>
    %38 = tpu.matmul %32, %6, %cst_15 {dimension_numbers = #tpu.dot_dimension_numbers<[1], [0], [0], [1], [0, 0, 1, 1], [], []>} : vector<2x128xf32>, vector<128x512xf32>, vector<2x512xf32> -> vector<2x512xf32>
    %39 = arith.addf %38, %37 : vector<2x512xf32>
    %40 = vector.extract_strided_slice %39 {offsets = [0, 0], sizes = [2, 384], strides = [1, 1]} : vector<2x512xf32> to vector<2x384xf32>
    %41 = arith.negf %40 : vector<2x384xf32>
    %42 = math.exp %41 : vector<2x384xf32>
    %cst_16 = arith.constant 1.000000e+00 : f32
    %43 = vector.broadcast %cst_16 : f32 to vector<2x384xf32>
    %44 = arith.addf %43, %42 : vector<2x384xf32>
    %45 = arith.divf %43, %44 : vector<2x384xf32>
    %46 = vector.extract_strided_slice %45 {offsets = [0, 0], sizes = [2, 128], strides = [1, 1]} : vector<2x384xf32> to vector<2x128xf32>
    %47 = vector.extract_strided_slice %45 {offsets = [0, 128], sizes = [2, 128], strides = [1, 1]} : vector<2x384xf32> to vector<2x128xf32>
    %48 = vector.extract_strided_slice %45 {offsets = [0, 256], sizes = [2, 128], strides = [1, 1]} : vector<2x384xf32> to vector<2x128xf32>
    %49 = vector.extract_strided_slice %39 {offsets = [0, 384], sizes = [2, 128], strides = [1, 1]} : vector<2x512xf32> to vector<2x128xf32>
    %50 = math.tanh %49 : vector<2x128xf32>
    %51 = arith.mulf %47, %36 : vector<2x128xf32>
    %52 = arith.mulf %46, %50 : vector<2x128xf32>
    %53 = arith.addf %51, %52 : vector<2x128xf32>
    %54 = math.tanh %53 : vector<2x128xf32>
    %55 = arith.mulf %48, %54 : vector<2x128xf32>
    %56 = vector.extract_strided_slice %5 {offsets = [4, 0], sizes = [2, 512], strides = [1, 1]} : vector<16x512xf32> to vector<2x512xf32>
    %cst_17 = arith.constant dense<0.000000e+00> : vector<2x512xf32>
    %57 = tpu.matmul %55, %6, %cst_17 {dimension_numbers = #tpu.dot_dimension_numbers<[1], [0], [0], [1], [0, 0, 1, 1], [], []>} : vector<2x128xf32>, vector<128x512xf32>, vector<2x512xf32> -> vector<2x512xf32>
    %58 = arith.addf %57, %56 : vector<2x512xf32>
    %59 = vector.extract_strided_slice %58 {offsets = [0, 0], sizes = [2, 384], strides = [1, 1]} : vector<2x512xf32> to vector<2x384xf32>
    %60 = arith.negf %59 : vector<2x384xf32>
    %61 = math.exp %60 : vector<2x384xf32>
    %cst_18 = arith.constant 1.000000e+00 : f32
    %62 = vector.broadcast %cst_18 : f32 to vector<2x384xf32>
    %63 = arith.addf %62, %61 : vector<2x384xf32>
    %64 = arith.divf %62, %63 : vector<2x384xf32>
    %65 = vector.extract_strided_slice %64 {offsets = [0, 0], sizes = [2, 128], strides = [1, 1]} : vector<2x384xf32> to vector<2x128xf32>
    %66 = vector.extract_strided_slice %64 {offsets = [0, 128], sizes = [2, 128], strides = [1, 1]} : vector<2x384xf32> to vector<2x128xf32>
    %67 = vector.extract_strided_slice %64 {offsets = [0, 256], sizes = [2, 128], strides = [1, 1]} : vector<2x384xf32> to vector<2x128xf32>
    %68 = vector.extract_strided_slice %58 {offsets = [0, 384], sizes = [2, 128], strides = [1, 1]} : vector<2x512xf32> to vector<2x128xf32>
    %69 = math.tanh %68 : vector<2x128xf32>
    %70 = arith.mulf %66, %53 : vector<2x128xf32>
    %71 = arith.mulf %65, %69 : vector<2x128xf32>
    %72 = arith.addf %70, %71 : vector<2x128xf32>
    %73 = math.tanh %72 : vector<2x128xf32>
    %74 = arith.mulf %67, %73 : vector<2x128xf32>
    %75 = vector.extract_strided_slice %5 {offsets = [6, 0], sizes = [2, 512], strides = [1, 1]} : vector<16x512xf32> to vector<2x512xf32>
    %cst_19 = arith.constant dense<0.000000e+00> : vector<2x512xf32>
    %76 = tpu.matmul %74, %6, %cst_19 {dimension_numbers = #tpu.dot_dimension_numbers<[1], [0], [0], [1], [0, 0, 1, 1], [], []>} : vector<2x128xf32>, vector<128x512xf32>, vector<2x512xf32> -> vector<2x512xf32>
    %77 = arith.addf %76, %75 : vector<2x512xf32>
    %78 = vector.extract_strided_slice %77 {offsets = [0, 0], sizes = [2, 384], strides = [1, 1]} : vector<2x512xf32> to vector<2x384xf32>
    %79 = arith.negf %78 : vector<2x384xf32>
    %80 = math.exp %79 : vector<2x384xf32>
    %cst_20 = arith.constant 1.000000e+00 : f32
    %81 = vector.broadcast %cst_20 : f32 to vector<2x384xf32>
    %82 = arith.addf %81, %80 : vector<2x384xf32>
    %83 = arith.divf %81, %82 : vector<2x384xf32>
    %84 = vector.extract_strided_slice %83 {offsets = [0, 0], sizes = [2, 128], strides = [1, 1]} : vector<2x384xf32> to vector<2x128xf32>
    %85 = vector.extract_strided_slice %83 {offsets = [0, 128], sizes = [2, 128], strides = [1, 1]} : vector<2x384xf32> to vector<2x128xf32>
    %86 = vector.extract_strided_slice %83 {offsets = [0, 256], sizes = [2, 128], strides = [1, 1]} : vector<2x384xf32> to vector<2x128xf32>
    %87 = vector.extract_strided_slice %77 {offsets = [0, 384], sizes = [2, 128], strides = [1, 1]} : vector<2x512xf32> to vector<2x128xf32>
    %88 = math.tanh %87 : vector<2x128xf32>
    %89 = arith.mulf %85, %72 : vector<2x128xf32>
    %90 = arith.mulf %84, %88 : vector<2x128xf32>
    %91 = arith.addf %89, %90 : vector<2x128xf32>
    %92 = math.tanh %91 : vector<2x128xf32>
    %93 = arith.mulf %86, %92 : vector<2x128xf32>
    %94 = vector.extract_strided_slice %5 {offsets = [8, 0], sizes = [2, 512], strides = [1, 1]} : vector<16x512xf32> to vector<2x512xf32>
    %cst_21 = arith.constant dense<0.000000e+00> : vector<2x512xf32>
    %95 = tpu.matmul %93, %6, %cst_21 {dimension_numbers = #tpu.dot_dimension_numbers<[1], [0], [0], [1], [0, 0, 1, 1], [], []>} : vector<2x128xf32>, vector<128x512xf32>, vector<2x512xf32> -> vector<2x512xf32>
    %96 = arith.addf %95, %94 : vector<2x512xf32>
    %97 = vector.extract_strided_slice %96 {offsets = [0, 0], sizes = [2, 384], strides = [1, 1]} : vector<2x512xf32> to vector<2x384xf32>
    %98 = arith.negf %97 : vector<2x384xf32>
    %99 = math.exp %98 : vector<2x384xf32>
    %cst_22 = arith.constant 1.000000e+00 : f32
    %100 = vector.broadcast %cst_22 : f32 to vector<2x384xf32>
    %101 = arith.addf %100, %99 : vector<2x384xf32>
    %102 = arith.divf %100, %101 : vector<2x384xf32>
    %103 = vector.extract_strided_slice %102 {offsets = [0, 0], sizes = [2, 128], strides = [1, 1]} : vector<2x384xf32> to vector<2x128xf32>
    %104 = vector.extract_strided_slice %102 {offsets = [0, 128], sizes = [2, 128], strides = [1, 1]} : vector<2x384xf32> to vector<2x128xf32>
    %105 = vector.extract_strided_slice %102 {offsets = [0, 256], sizes = [2, 128], strides = [1, 1]} : vector<2x384xf32> to vector<2x128xf32>
    %106 = vector.extract_strided_slice %96 {offsets = [0, 384], sizes = [2, 128], strides = [1, 1]} : vector<2x512xf32> to vector<2x128xf32>
    %107 = math.tanh %106 : vector<2x128xf32>
    %108 = arith.mulf %104, %91 : vector<2x128xf32>
    %109 = arith.mulf %103, %107 : vector<2x128xf32>
    %110 = arith.addf %108, %109 : vector<2x128xf32>
    %111 = math.tanh %110 : vector<2x128xf32>
    %112 = arith.mulf %105, %111 : vector<2x128xf32>
    %113 = vector.extract_strided_slice %5 {offsets = [10, 0], sizes = [2, 512], strides = [1, 1]} : vector<16x512xf32> to vector<2x512xf32>
    %cst_23 = arith.constant dense<0.000000e+00> : vector<2x512xf32>
    %114 = tpu.matmul %112, %6, %cst_23 {dimension_numbers = #tpu.dot_dimension_numbers<[1], [0], [0], [1], [0, 0, 1, 1], [], []>} : vector<2x128xf32>, vector<128x512xf32>, vector<2x512xf32> -> vector<2x512xf32>
    %115 = arith.addf %114, %113 : vector<2x512xf32>
    %116 = vector.extract_strided_slice %115 {offsets = [0, 0], sizes = [2, 384], strides = [1, 1]} : vector<2x512xf32> to vector<2x384xf32>
    %117 = arith.negf %116 : vector<2x384xf32>
    %118 = math.exp %117 : vector<2x384xf32>
    %cst_24 = arith.constant 1.000000e+00 : f32
    %119 = vector.broadcast %cst_24 : f32 to vector<2x384xf32>
    %120 = arith.addf %119, %118 : vector<2x384xf32>
    %121 = arith.divf %119, %120 : vector<2x384xf32>
    %122 = vector.extract_strided_slice %121 {offsets = [0, 0], sizes = [2, 128], strides = [1, 1]} : vector<2x384xf32> to vector<2x128xf32>
    %123 = vector.extract_strided_slice %121 {offsets = [0, 128], sizes = [2, 128], strides = [1, 1]} : vector<2x384xf32> to vector<2x128xf32>
    %124 = vector.extract_strided_slice %121 {offsets = [0, 256], sizes = [2, 128], strides = [1, 1]} : vector<2x384xf32> to vector<2x128xf32>
    %125 = vector.extract_strided_slice %115 {offsets = [0, 384], sizes = [2, 128], strides = [1, 1]} : vector<2x512xf32> to vector<2x128xf32>
    %126 = math.tanh %125 : vector<2x128xf32>
    %127 = arith.mulf %123, %110 : vector<2x128xf32>
    %128 = arith.mulf %122, %126 : vector<2x128xf32>
    %129 = arith.addf %127, %128 : vector<2x128xf32>
    %130 = math.tanh %129 : vector<2x128xf32>
    %131 = arith.mulf %124, %130 : vector<2x128xf32>
    %132 = vector.extract_strided_slice %5 {offsets = [12, 0], sizes = [2, 512], strides = [1, 1]} : vector<16x512xf32> to vector<2x512xf32>
    %cst_25 = arith.constant dense<0.000000e+00> : vector<2x512xf32>
    %133 = tpu.matmul %131, %6, %cst_25 {dimension_numbers = #tpu.dot_dimension_numbers<[1], [0], [0], [1], [0, 0, 1, 1], [], []>} : vector<2x128xf32>, vector<128x512xf32>, vector<2x512xf32> -> vector<2x512xf32>
    %134 = arith.addf %133, %132 : vector<2x512xf32>
    %135 = vector.extract_strided_slice %134 {offsets = [0, 0], sizes = [2, 384], strides = [1, 1]} : vector<2x512xf32> to vector<2x384xf32>
    %136 = arith.negf %135 : vector<2x384xf32>
    %137 = math.exp %136 : vector<2x384xf32>
    %cst_26 = arith.constant 1.000000e+00 : f32
    %138 = vector.broadcast %cst_26 : f32 to vector<2x384xf32>
    %139 = arith.addf %138, %137 : vector<2x384xf32>
    %140 = arith.divf %138, %139 : vector<2x384xf32>
    %141 = vector.extract_strided_slice %140 {offsets = [0, 0], sizes = [2, 128], strides = [1, 1]} : vector<2x384xf32> to vector<2x128xf32>
    %142 = vector.extract_strided_slice %140 {offsets = [0, 128], sizes = [2, 128], strides = [1, 1]} : vector<2x384xf32> to vector<2x128xf32>
    %143 = vector.extract_strided_slice %140 {offsets = [0, 256], sizes = [2, 128], strides = [1, 1]} : vector<2x384xf32> to vector<2x128xf32>
    %144 = vector.extract_strided_slice %134 {offsets = [0, 384], sizes = [2, 128], strides = [1, 1]} : vector<2x512xf32> to vector<2x128xf32>
    %145 = math.tanh %144 : vector<2x128xf32>
    %146 = arith.mulf %142, %129 : vector<2x128xf32>
    %147 = arith.mulf %141, %145 : vector<2x128xf32>
    %148 = arith.addf %146, %147 : vector<2x128xf32>
    %149 = math.tanh %148 : vector<2x128xf32>
    %150 = arith.mulf %143, %149 : vector<2x128xf32>
    %151 = vector.extract_strided_slice %5 {offsets = [14, 0], sizes = [2, 512], strides = [1, 1]} : vector<16x512xf32> to vector<2x512xf32>
    %cst_27 = arith.constant dense<0.000000e+00> : vector<2x512xf32>
    %152 = tpu.matmul %150, %6, %cst_27 {dimension_numbers = #tpu.dot_dimension_numbers<[1], [0], [0], [1], [0, 0, 1, 1], [], []>} : vector<2x128xf32>, vector<128x512xf32>, vector<2x512xf32> -> vector<2x512xf32>
    %153 = arith.addf %152, %151 : vector<2x512xf32>
    %154 = vector.extract_strided_slice %153 {offsets = [0, 0], sizes = [2, 384], strides = [1, 1]} : vector<2x512xf32> to vector<2x384xf32>
    %155 = arith.negf %154 : vector<2x384xf32>
    %156 = math.exp %155 : vector<2x384xf32>
    %cst_28 = arith.constant 1.000000e+00 : f32
    %157 = vector.broadcast %cst_28 : f32 to vector<2x384xf32>
    %158 = arith.addf %157, %156 : vector<2x384xf32>
    %159 = arith.divf %157, %158 : vector<2x384xf32>
    %160 = vector.extract_strided_slice %159 {offsets = [0, 0], sizes = [2, 128], strides = [1, 1]} : vector<2x384xf32> to vector<2x128xf32>
    %161 = vector.extract_strided_slice %159 {offsets = [0, 128], sizes = [2, 128], strides = [1, 1]} : vector<2x384xf32> to vector<2x128xf32>
    %162 = vector.extract_strided_slice %159 {offsets = [0, 256], sizes = [2, 128], strides = [1, 1]} : vector<2x384xf32> to vector<2x128xf32>
    %163 = vector.extract_strided_slice %153 {offsets = [0, 384], sizes = [2, 128], strides = [1, 1]} : vector<2x512xf32> to vector<2x128xf32>
    %164 = math.tanh %163 : vector<2x128xf32>
    %165 = arith.mulf %161, %148 : vector<2x128xf32>
    %166 = arith.mulf %160, %164 : vector<2x128xf32>
    %167 = arith.addf %165, %166 : vector<2x128xf32>
    %168 = math.tanh %167 : vector<2x128xf32>
    %169 = arith.mulf %162, %168 : vector<2x128xf32>
    %170 = vector.extract_strided_slice %5 {offsets = [0, 0], sizes = [2, 512], strides = [1, 1]} : vector<16x512xf32> to vector<2x512xf32>
    %cst_29 = arith.constant dense<0.000000e+00> : vector<2x512xf32>
    %171 = tpu.matmul %169, %6, %cst_29 {dimension_numbers = #tpu.dot_dimension_numbers<[1], [0], [0], [1], [0, 0, 1, 1], [], []>} : vector<2x128xf32>, vector<128x512xf32>, vector<2x512xf32> -> vector<2x512xf32>
    %172 = arith.addf %171, %170 : vector<2x512xf32>
    %173 = vector.extract_strided_slice %172 {offsets = [0, 0], sizes = [2, 384], strides = [1, 1]} : vector<2x512xf32> to vector<2x384xf32>
    %174 = arith.negf %173 : vector<2x384xf32>
    %175 = math.exp %174 : vector<2x384xf32>
    %cst_30 = arith.constant 1.000000e+00 : f32
    %176 = vector.broadcast %cst_30 : f32 to vector<2x384xf32>
    %177 = arith.addf %176, %175 : vector<2x384xf32>
    %178 = arith.divf %176, %177 : vector<2x384xf32>
    %179 = vector.extract_strided_slice %178 {offsets = [0, 0], sizes = [2, 128], strides = [1, 1]} : vector<2x384xf32> to vector<2x128xf32>
    %180 = vector.extract_strided_slice %178 {offsets = [0, 128], sizes = [2, 128], strides = [1, 1]} : vector<2x384xf32> to vector<2x128xf32>
    %181 = vector.extract_strided_slice %178 {offsets = [0, 256], sizes = [2, 128], strides = [1, 1]} : vector<2x384xf32> to vector<2x128xf32>
    %182 = vector.extract_strided_slice %172 {offsets = [0, 384], sizes = [2, 128], strides = [1, 1]} : vector<2x512xf32> to vector<2x128xf32>
    %183 = math.tanh %182 : vector<2x128xf32>
    %184 = arith.mulf %180, %167 : vector<2x128xf32>
    %185 = arith.mulf %179, %183 : vector<2x128xf32>
    %186 = arith.addf %184, %185 : vector<2x128xf32>
    %187 = math.tanh %186 : vector<2x128xf32>
    %188 = arith.mulf %181, %187 : vector<2x128xf32>
    %c0_31 = arith.constant 0 : index
    %c0_32 = arith.constant 0 : index
    %189 = vector.load %arg4[%c0_31, %c0_32] : memref<128x128xf32, #tpu.memory_space<vmem>>, vector<128x128xf32>
    %cst_33 = arith.constant dense<0.000000e+00> : vector<2x128xf32>
    %190 = tpu.matmul %188, %189, %cst_33 {dimension_numbers = #tpu.dot_dimension_numbers<[1], [0], [0], [1], [0, 0, 1, 1], [], []>} : vector<2x128xf32>, vector<128x128xf32>, vector<2x128xf32> -> vector<2x128xf32>
    %c0_34 = arith.constant 0 : index
    %c0_35 = arith.constant 0 : index
    %191 = vector.load %arg5[%c0_34, %c0_35] : memref<1x128xf32, #tpu.memory_space<vmem>>, vector<1x128xf32>
    %192 = vector.broadcast %191 : vector<1x128xf32> to vector<2x128xf32>
    %193 = arith.addf %190, %192 : vector<2x128xf32>
    %c0_36 = arith.constant 0 : index
    %c0_37 = arith.constant 0 : index
    %194 = vector.load %arg9[%c0_36, %c0_37] : memref<2x128xf32, #tpu.memory_space<vmem>>, vector<2x128xf32>
    tpu.vector_store %arg9[%c0_36, %c0_37], %193 {strides = array<i32>} : memref<2x128xf32, #tpu.memory_space<vmem>>, vector<2x128xf32>,
    return
  }
}

</mosaic_0001>

<llo_original>
// kernel: tpu_custom_call.1
$region0: #{tpu_custom_call.1}
  #allocation0 [shape = 'u32[]', space=smem, size = 0x4, offset = 0x4, fixed_abs, tag = 'smem constant byte address 0x4 - core index']
  #allocation1 [shape = 'u32[144,128]{1,0:T(1,128)}', space=vmem, size = 0x12000, scoped, tag = 'internal scratch']
  %s0 = inlined_call_operand.hbm [shape: f32[16,64], index: 0, kind: input, shape index: {}]
  %s1 = inlined_call_operand.hbm [shape: f32[64,512], index: 1, kind: input, shape index: {}]
  %s2 = inlined_call_operand.hbm [shape: f32[1,512], index: 2, kind: input, shape index: {}]
  %s3 = inlined_call_operand.hbm [shape: f32[128,512], index: 3, kind: input, shape index: {}]
  %s4 = inlined_call_operand.hbm [shape: f32[128,128], index: 4, kind: input, shape index: {}]
  %s5 = inlined_call_operand.vmem [shape: f32[1,128], index: 5, kind: input, shape index: {}]
  %s6 = inlined_call_operand.vmem [shape: f32[2,128], index: 6, kind: input, shape index: {}]
  %s7 = inlined_call_operand.vmem [shape: f32[2,128], index: 7, kind: input, shape index: {}]
  %s8 = inlined_call_operand.vmem [shape: f32[1,128], index: 8, kind: input, shape index: {}]
  %s9 = inlined_call_operand.hbm [shape: f32[2,128], index: 9, kind: output, shape index: {}]
  %s10 = sld [smem:[#allocation0]]
  $region66: #{tpu_custom_call.1} parent=0
    _
  %s12 = ssub.s32 1, %s10
  %s13 = scalar_select 0, %s12, %s10
  $region1: #{tpu_custom_call.1} parent=0
    #allocation2 [shape = 'u8[8192]{0}', space=vmem, size = 0x2000, scoped, tag = 'input window, operand 0, single buffered']
    #allocation3 [shape = 's32[1]{0}', space=sflag, size = 0x4, scoped, tag = 'scoped memory for tpu_custom_call.1']
    #allocation4 [shape = 's32[1]{0}', space=sflag, size = 0x4, scoped, tag = 'scoped memory for tpu_custom_call.1']
    #allocation5 [shape = 'u8[131072]{0}', space=vmem, size = 0x20000, scoped, tag = 'input window, operand 1, single buffered']
    #allocation6 [shape = 's32[1]{0}', space=sflag, size = 0x4, scoped, tag = 'scoped memory for tpu_custom_call.1']
    #allocation7 [shape = 'u8[2048]{0}', space=vmem, size = 0x800, scoped, tag = 'input window, operand 2, single buffered']
    #allocation8 [shape = 'u8[262144]{0}', space=vmem, size = 0x40000, scoped, tag = 'input window, operand 3, single buffered']
    #allocation9 [shape = 's32[1]{0}', space=sflag, size = 0x4, scoped, tag = 'scoped memory for tpu_custom_call.1']
    #allocation10 [shape = 'u8[65536]{0}', space=vmem, size = 0x10000, scoped, tag = 'input window, operand 4, single buffered']
    #allocation11 [shape = 'u8[1024]{0}', space=vmem, size = 0x400, scoped, tag = 'output window, operand 0, single buffered']
    %14 = vsyncpa [#allocation3], 0
    %15 = vsyncpa [#allocation6], 0
    %16 = vsyncpa [#allocation9], 0
    %17 = vsyncpa [#allocation4], 0
    // Predicated region
    $region2: #{tpu_custom_call.1} parent=1 // pred_check
      _
    $region3: #{tpu_custom_call.1} parent=1 // pred_check_branch
      %19 = sbr.rel (0) target = $region5
    $region4: #{tpu_custom_call.1} parent=1 // pred_region
      %s21 = ssub.s32 256, 256
      %22 = vsyncadd [#allocation3], %s21
      %s23 = sshll.u32 [#allocation2], 4
      %s24 = int_to_ptr.vmem [resolvable:$true] %s23
      %29 = dma.hbm_to_vmem [thread:$0]  %s0, 256, %s24, [#allocation3], 128, 128, 8
    $region5: #{tpu_custom_call.1} parent=1 // pred_fallthru
      _
    // Predicated region
    $region6: #{tpu_custom_call.1} parent=1 // pred_check
      _
    $region7: #{tpu_custom_call.1} parent=1 // pred_check_branch
      %31 = sbr.rel (0) target = $region9
    $region8: #{tpu_custom_call.1} parent=1 // pred_region
      %s33 = ssub.s32 4096, 4096
      %34 = vsyncadd [#allocation6], %s33
      %s35 = sshll.u32 [#allocation5], 4
      %s36 = int_to_ptr.vmem [resolvable:$true] %s35
      %41 = dma.hbm_to_vmem [thread:$0]  %s1, 4096, %s36, [#allocation6], 512, 512, 32
    $region9: #{tpu_custom_call.1} parent=1 // pred_fallthru
      _
    // Predicated region
    $region10: #{tpu_custom_call.1} parent=1 // pred_check
      _
    $region11: #{tpu_custom_call.1} parent=1 // pred_check_branch
      %43 = sbr.rel (0) target = $region13
    $region12: #{tpu_custom_call.1} parent=1 // pred_region
      %s45 = ssub.s32 64, 64
      %46 = vsyncadd [#allocation6], %s45
      %s48 = sshll.u32 [#allocation7], 4
      %s49 = int_to_ptr.vmem [resolvable:$true] %s48
      %51 = dma.hbm_to_vmem [thread:$0]  %s2, 64, %s49, [#allocation6]
    $region13: #{tpu_custom_call.1} parent=1 // pred_fallthru
      _
    // Predicated region
    $region14: #{tpu_custom_call.1} parent=1 // pred_check
      _
    $region15: #{tpu_custom_call.1} parent=1 // pred_check_branch
      %53 = sbr.rel (0) target = $region17
    $region16: #{tpu_custom_call.1} parent=1 // pred_region
      %s55 = ssub.s32 8192, 8192
      %56 = vsyncadd [#allocation9], %s55
      %s57 = sshll.u32 [#allocation8], 4
      %s58 = int_to_ptr.vmem [resolvable:$true] %s57
      %63 = dma.hbm_to_vmem [thread:$0]  %s3, 8192, %s58, [#allocation9], 512, 512, 32
    $region17: #{tpu_custom_call.1} parent=1 // pred_fallthru
      _
    // Predicated region
    $region18: #{tpu_custom_call.1} parent=1 // pred_check
      _
    $region19: #{tpu_custom_call.1} parent=1 // pred_check_branch
      %65 = sbr.rel (0) target = $region21
    $region20: #{tpu_custom_call.1} parent=1 // pred_region
      %s67 = ssub.s32 2048, 2048
      %68 = vsyncadd [#allocation9], %s67
      %s69 = sshll.u32 [#allocation10], 4
      %s70 = int_to_ptr.vmem [resolvable:$true] %s69
      %75 = dma.hbm_to_vmem [thread:$0]  %s4, 2048, %s70, [#allocation9], 128, 128, 8
    $region21: #{tpu_custom_call.1} parent=1 // pred_fallthru
      _
    // Predicated region
    $region22: #{tpu_custom_call.1} parent=1 // pred_check
      _
    $region23: #{tpu_custom_call.1} parent=1 // pred_check_branch
      %77 = sbr.rel (0) target = $region25
    $region24: #{tpu_custom_call.1} parent=1 // pred_region
      _
    $region25: #{tpu_custom_call.1} parent=1 // pred_fallthru
      _
    // Predicated region
    $region26: #{tpu_custom_call.1} parent=1 // pred_check
      _
    $region27: #{tpu_custom_call.1} parent=1 // pred_check_branch
      %79 = sbr.rel (0) target = $region29
    $region28: #{tpu_custom_call.1} parent=1 // pred_region
      _
    $region29: #{tpu_custom_call.1} parent=1 // pred_fallthru
      _
    // Predicated region
    $region30: #{tpu_custom_call.1} parent=1 // pred_check
      _
    $region31: #{tpu_custom_call.1} parent=1 // pred_check_branch
      %81 = sbr.rel (0) target = $region33
    $region32: #{tpu_custom_call.1} parent=1 // pred_region
      _
    $region33: #{tpu_custom_call.1} parent=1 // pred_fallthru
      _
    // Predicated region
    $region34: #{tpu_custom_call.1} parent=1 // pred_check
      _
    $region35: #{tpu_custom_call.1} parent=1 // pred_check_branch
      %83 = sbr.rel (0) target = $region37
    $region36: #{tpu_custom_call.1} parent=1 // pred_region
      _
    $region37: #{tpu_custom_call.1} parent=1 // pred_fallthru
      _
    // Predicated region
    $region38: #{tpu_custom_call.1} parent=1 // pred_check
      _
    $region39: #{tpu_custom_call.1} parent=1 // pred_check_branch
      %85 = sbr.rel (0) target = $region41
    $region40: #{tpu_custom_call.1} parent=1 // pred_region
      %86 = dma.done [#allocation3], 256
    $region41: #{tpu_custom_call.1} parent=1 // pred_fallthru
      _
    // Predicated region
    $region42: #{tpu_custom_call.1} parent=1 // pred_check
      _
    $region43: #{tpu_custom_call.1} parent=1 // pred_check_branch
      %88 = sbr.rel (0) target = $region45
    $region44: #{tpu_custom_call.1} parent=1 // pred_region
      %89 = dma.done [#allocation6], 4096
    $region45: #{tpu_custom_call.1} parent=1 // pred_fallthru
      _
    // Predicated region
    $region46: #{tpu_custom_call.1} parent=1 // pred_check
      _
    $region47: #{tpu_custom_call.1} parent=1 // pred_check_branch
      %91 = sbr.rel (0) target = $region49
    $region48: #{tpu_custom_call.1} parent=1 // pred_region
      %92 = dma.done [#allocation6], 64
    $region49: #{tpu_custom_call.1} parent=1 // pred_fallthru
      _
    // Predicated region
    $region50: #{tpu_custom_call.1} parent=1 // pred_check
      _
    $region51: #{tpu_custom_call.1} parent=1 // pred_check_branch
      %94 = sbr.rel (0) target = $region53
    $region52: #{tpu_custom_call.1} parent=1 // pred_region
      %95 = dma.done [#allocation9], 8192
    $region53: #{tpu_custom_call.1} parent=1 // pred_fallthru
      _
    // Predicated region
    $region54: #{tpu_custom_call.1} parent=1 // pred_check
      _
    $region55: #{tpu_custom_call.1} parent=1 // pred_check_branch
      %97 = sbr.rel (0) target = $region57
    $region56: #{tpu_custom_call.1} parent=1 // pred_region
      %98 = dma.done [#allocation9], 2048
    $region57: #{tpu_custom_call.1} parent=1 // pred_fallthru
      _
    %v99 = vld [vmem:[#allocation2] sm:$0xff]
    %v100 = vld [vmem:[#allocation2 + $0x8] sm:$0xff]
    %v101 = vld [vmem:[#allocation5] sm:$0xff]
    %v102 = vld [vmem:[#allocation5 + $0x8] sm:$0xff]
    %v103 = vld [vmem:[#allocation5 + $0x10] sm:$0xff]
    %v104 = vld [vmem:[#allocation5 + $0x18] sm:$0xff]
    %v105 = vld [vmem:[#allocation5 + $0x20] sm:$0xff]
    %v106 = vld [vmem:[#allocation5 + $0x28] sm:$0xff]
    %v107 = vld [vmem:[#allocation5 + $0x30] sm:$0xff]
    %v108 = vld [vmem:[#allocation5 + $0x38] sm:$0xff]
    %v109 = vld [vmem:[#allocation5 + $0x40] sm:$0xff]
    %v110 = vld [vmem:[#allocation5 + $0x48] sm:$0xff]
    %v111 = vld [vmem:[#allocation5 + $0x50] sm:$0xff]
    %v112 = vld [vmem:[#allocation5 + $0x58] sm:$0xff]
    %v113 = vld [vmem:[#allocation5 + $0x60] sm:$0xff]
    %v114 = vld [vmem:[#allocation5 + $0x68] sm:$0xff]
    %v115 = vld [vmem:[#allocation5 + $0x70] sm:$0xff]
    %v116 = vld [vmem:[#allocation5 + $0x78] sm:$0xff]
    %v117 = vld [vmem:[#allocation5 + $0x80] sm:$0xff]
    %v118 = vld [vmem:[#allocation5 + $0x88] sm:$0xff]
    %v119 = vld [vmem:[#allocation5 + $0x90] sm:$0xff]
    %v120 = vld [vmem:[#allocation5 + $0x98] sm:$0xff]
    %v121 = vld [vmem:[#allocation5 + $0xa0] sm:$0xff]
    %v122 = vld [vmem:[#allocation5 + $0xa8] sm:$0xff]
    %v123 = vld [vmem:[#allocation5 + $0xb0] sm:$0xff]
    %v124 = vld [vmem:[#allocation5 + $0xb8] sm:$0xff]
    %v125 = vld [vmem:[#allocation5 + $0xc0] sm:$0xff]
    %v126 = vld [vmem:[#allocation5 + $0xc8] sm:$0xff]
    %v127 = vld [vmem:[#allocation5 + $0xd0] sm:$0xff]
    %v128 = vld [vmem:[#allocation5 + $0xd8] sm:$0xff]
    %v129 = vld [vmem:[#allocation5 + $0xe0] sm:$0xff]
    %v130 = vld [vmem:[#allocation5 + $0xe8] sm:$0xff]
    %v131 = vld [vmem:[#allocation5 + $0xf0] sm:$0xff]
    %v132 = vld [vmem:[#allocation5 + $0xf8] sm:$0xff]
    %v133 = vld [vmem:[#allocation7] sm:$0xf]
    %v135 = vlaneseq
    %v136 = vshrl.u32 %v135, 7
    %v137 = vsub.s32 0, %v136
    %v138 = vrot.slane %v133, %v137
    %v139 = vlaneseq
    %v140 = vshrl.u32 %v139, 7
    %v141 = vsub.s32 1, %v140
    %v142 = vrot.slane %v133, %v141
    %v143 = vlaneseq
    %v144 = vshrl.u32 %v143, 7
    %v145 = vsub.s32 2, %v144
    %v146 = vrot.slane %v133, %v145
    %v147 = vlaneseq
    %v148 = vshrl.u32 %v147, 7
    %v149 = vsub.s32 3, %v148
    %v150 = vrot.slane %v133, %v149
    %vm155 = vcmask 523264
    %v157 = vsel %vm155, %v99, 0
    %v160 = vsel %vm155, %v100, 0
    %162 = vmatprep.subr.mxu0 0.0
    %163 = vmatpush1.msra.mxu0 0.0
    %164 = vmatprep.subr.mxu0 0.0
    %165 = vmatpush1.msra.mxu0 0.0
    %166 = vmatprep.subr.mxu0 0.0
    %167 = vmatpush1.msra.mxu0 0.0
    %168 = vmatprep.subr.mxu0 0.0
    %169 = vmatpush1.msra.mxu0 0.0
    %170 = vmatprep.subr.mxu0 0.0
    %171 = vmatpush1.msra.mxu0 0.0
    %172 = vmatprep.subr.mxu0 0.0
    %173 = vmatpush1.msra.mxu0 0.0
    %174 = vmatprep.subr.mxu0 0.0
    %175 = vmatpush1.msra.mxu0 0.0
    %176 = vmatprep.subr.mxu0 0.0
    %177 = vmatpush1.msra.mxu0 0.0
    %178 = vmatprep.subr.mxu0 %v130
    %179 = vmatpush1.msra.mxu0 %v129
    %180 = vmatprep.subr.mxu0 %v126
    %181 = vmatpush1.msra.mxu0 %v125
    %182 = vmatprep.subr.mxu0 %v122
    %183 = vmatpush1.msra.mxu0 %v121
    %184 = vmatprep.subr.mxu0 %v118
    %185 = vmatpush1.msra.mxu0 %v117
    %186 = vmatprep.subr.mxu0 %v114
    %187 = vmatpush1.msra.mxu0 %v113
    %188 = vmatprep.subr.mxu0 %v110
    %189 = vmatpush1.msra.mxu0 %v109
    %190 = vmatprep.subr.mxu0 %v106
    %191 = vmatpush1.msra.mxu0 %v105
    %192 = vmatprep.subr.mxu0 %v102
    %193 = vmatpush1.msra.mxu0 %v101
    %194 = vmatprep.subr.mxu0 0.0
    %195 = vmatpush2.msra.mxu0 0.0
    %196 = vmatprep.subr.mxu0 0.0
    %197 = vmatpush2.msra.mxu0 0.0
    %198 = vmatprep.subr.mxu0 0.0
    %199 = vmatpush2.msra.mxu0 0.0
    %200 = vmatprep.subr.mxu0 0.0
    %201 = vmatpush2.msra.mxu0 0.0
    %202 = vmatprep.subr.mxu0 0.0
    %203 = vmatpush2.msra.mxu0 0.0
    %204 = vmatprep.subr.mxu0 0.0
    %205 = vmatpush2.msra.mxu0 0.0
    %206 = vmatprep.subr.mxu0 0.0
    %207 = vmatpush2.msra.mxu0 0.0
    %208 = vmatprep.subr.mxu0 0.0
    %209 = vmatpush2.msra.mxu0 0.0
    %210 = vmatprep.subr.mxu0 0.0
    %211 = vmatpush2.msra.mxu0 0.0
    %212 = vmatprep.subr.mxu0 0.0
    %213 = vmatpush2.msra.mxu0 0.0
    %214 = vmatprep.subr.mxu0 0.0
    %215 = vmatpush2.msra.mxu0 0.0
    %216 = vmatprep.subr.mxu0 0.0
    %217 = vmatpush2.msra.mxu0 0.0
    %218 = vmatprep.subr.mxu0 0.0
    %219 = vmatpush2.msra.mxu0 0.0
    %220 = vmatprep.subr.mxu0 0.0
    %221 = vmatpush2.msra.mxu0 0.0
    %222 = vmatprep.subr.mxu0 0.0
    %223 = vmatpush2.msra.mxu0 0.0
    %224 = vmatprep.subr.mxu0 0.0
    %225 = vmatpush2.msra.mxu0 0.0
    %226 = vmatprep.mubr.f32.mxu0 0.0
    %227 = vmatmul.mubr.f32.gmra.mxu0 %v157
    %v228 = vpop.f32.mrf.mxu0
    %v229 = vadd.f32 %v138, %v228
    %v230 = vpop.f32.mrf.mxu0
    %v231 = vadd.f32 %v142, %v230
    %232 = vmatprep.mubr.f32.mxu0 0.0
    %233 = vmatmul.mubr.f32.gmra.mxu0 %v160
    %v234 = vpop.f32.mrf.mxu0
    %v235 = vadd.f32 %v138, %v234
    %v236 = vpop.f32.mrf.mxu0
    %v237 = vadd.f32 %v142, %v236
    %238 = vdwg.mxu0
    %239 = vmatprep.subr.mxu0 0.0
    %240 = vmatpush1.msra.mxu0 0.0
    %241 = vmatprep.subr.mxu0 0.0
    %242 = vmatpush1.msra.mxu0 0.0
    %243 = vmatprep.subr.mxu0 0.0
    %244 = vmatpush1.msra.mxu0 0.0
    %245 = vmatprep.subr.mxu0 0.0
    %246 = vmatpush1.msra.mxu0 0.0
    %247 = vmatprep.subr.mxu0 0.0
    %248 = vmatpush1.msra.mxu0 0.0
    %249 = vmatprep.subr.mxu0 0.0
    %250 = vmatpush1.msra.mxu0 0.0
    %251 = vmatprep.subr.mxu0 0.0
    %252 = vmatpush1.msra.mxu0 0.0
    %253 = vmatprep.subr.mxu0 0.0
    %254 = vmatpush1.msra.mxu0 0.0
    %255 = vmatprep.subr.mxu0 %v132
    %256 = vmatpush1.msra.mxu0 %v131
    %257 = vmatprep.subr.mxu0 %v128
    %258 = vmatpush1.msra.mxu0 %v127
    %259 = vmatprep.subr.mxu0 %v124
    %260 = vmatpush1.msra.mxu0 %v123
    %261 = vmatprep.subr.mxu0 %v120
    %262 = vmatpush1.msra.mxu0 %v119
    %263 = vmatprep.subr.mxu0 %v116
    %264 = vmatpush1.msra.mxu0 %v115
    %265 = vmatprep.subr.mxu0 %v112
    %266 = vmatpush1.msra.mxu0 %v111
    %267 = vmatprep.subr.mxu0 %v108
    %268 = vmatpush1.msra.mxu0 %v107
    %269 = vmatprep.subr.mxu0 %v104
    %270 = vmatpush1.msra.mxu0 %v103
    %271 = vmatprep.subr.mxu0 0.0
    %272 = vmatpush2.msra.mxu0 0.0
    %273 = vmatprep.subr.mxu0 0.0
    %274 = vmatpush2.msra.mxu0 0.0
    %275 = vmatprep.subr.mxu0 0.0
    %276 = vmatpush2.msra.mxu0 0.0
    %277 = vmatprep.subr.mxu0 0.0
    %278 = vmatpush2.msra.mxu0 0.0
    %279 = vmatprep.subr.mxu0 0.0
    %280 = vmatpush2.msra.mxu0 0.0
    %281 = vmatprep.subr.mxu0 0.0
    %282 = vmatpush2.msra.mxu0 0.0
    %283 = vmatprep.subr.mxu0 0.0
    %284 = vmatpush2.msra.mxu0 0.0
    %285 = vmatprep.subr.mxu0 0.0
    %286 = vmatpush2.msra.mxu0 0.0
    %287 = vmatprep.subr.mxu0 0.0
    %288 = vmatpush2.msra.mxu0 0.0
    %289 = vmatprep.subr.mxu0 0.0
    %290 = vmatpush2.msra.mxu0 0.0
    %291 = vmatprep.subr.mxu0 0.0
    %292 = vmatpush2.msra.mxu0 0.0
    %293 = vmatprep.subr.mxu0 0.0
    %294 = vmatpush2.msra.mxu0 0.0
    %295 = vmatprep.subr.mxu0 0.0
    %296 = vmatpush2.msra.mxu0 0.0
    %297 = vmatprep.subr.mxu0 0.0
    %298 = vmatpush2.msra.mxu0 0.0
    %299 = vmatprep.subr.mxu0 0.0
    %300 = vmatpush2.msra.mxu0 0.0
    %301 = vmatprep.subr.mxu0 0.0
    %302 = vmatpush2.msra.mxu0 0.0
    %303 = vmatprep.mubr.f32.mxu0 0.0
    %304 = vmatmul.mubr.f32.gmra.mxu0 %v157
    %v305 = vpop.f32.mrf.mxu0
    %v306 = vadd.f32 %v146, %v305
    %v307 = vpop.f32.mrf.mxu0
    %v308 = vadd.f32 %v150, %v307
    %309 = vmatprep.mubr.f32.mxu0 0.0
    %310 = vmatmul.mubr.f32.gmra.mxu0 %v160
    %v311 = vpop.f32.mrf.mxu0
    %v312 = vadd.f32 %v146, %v311
    %v313 = vpop.f32.mrf.mxu0
    %v314 = vadd.f32 %v150, %v313
    %315 = vdwg.mxu0
    %v316 = vld [vmem:[#allocation8] sm:$0xff]
    %v317 = vld [vmem:[#allocation8 + $0x8] sm:$0xff]
    %v318 = vld [vmem:[#allocation8 + $0x10] sm:$0xff]
    %v319 = vld [vmem:[#allocation8 + $0x18] sm:$0xff]
    %v320 = vld [vmem:[#allocation8 + $0x20] sm:$0xff]
    %v321 = vld [vmem:[#allocation8 + $0x28] sm:$0xff]
    %v322 = vld [vmem:[#allocation8 + $0x30] sm:$0xff]
    %v323 = vld [vmem:[#allocation8 + $0x38] sm:$0xff]
    %v324 = vld [vmem:[#allocation8 + $0x40] sm:$0xff]
    %v325 = vld [vmem:[#allocation8 + $0x48] sm:$0xff]
    %v326 = vld [vmem:[#allocation8 + $0x50] sm:$0xff]
    %v327 = vld [vmem:[#allocation8 + $0x58] sm:$0xff]
    %v328 = vld [vmem:[#allocation8 + $0x60] sm:$0xff]
    %v329 = vld [vmem:[#allocation8 + $0x68] sm:$0xff]
    %v330 = vld [vmem:[#allocation8 + $0x70] sm:$0xff]
    %v331 = vld [vmem:[#allocation8 + $0x78] sm:$0xff]
    %v332 = vld [vmem:[#allocation8 + $0x80] sm:$0xff]
    %v333 = vld [vmem:[#allocation8 + $0x88] sm:$0xff]
    %v334 = vld [vmem:[#allocation8 + $0x90] sm:$0xff]
    %v335 = vld [vmem:[#allocation8 + $0x98] sm:$0xff]
    %v336 = vld [vmem:[#allocation8 + $0xa0] sm:$0xff]
    %v337 = vld [vmem:[#allocation8 + $0xa8] sm:$0xff]
    %v338 = vld [vmem:[#allocation8 + $0xb0] sm:$0xff]
    %v339 = vld [vmem:[#allocation8 + $0xb8] sm:$0xff]
    %v340 = vld [vmem:[#allocation8 + $0xc0] sm:$0xff]
    %v341 = vld [vmem:[#allocation8 + $0xc8] sm:$0xff]
    %v342 = vld [vmem:[#allocation8 + $0xd0] sm:$0xff]
    %v343 = vld [vmem:[#allocation8 + $0xd8] sm:$0xff]
    %v344 = vld [vmem:[#allocation8 + $0xe0] sm:$0xff]
    %v345 = vld [vmem:[#allocation8 + $0xe8] sm:$0xff]
    %v346 = vld [vmem:[#allocation8 + $0xf0] sm:$0xff]
    %v347 = vld [vmem:[#allocation8 + $0xf8] sm:$0xff]
    %v348 = vld [vmem:[#allocation8 + $0x100] sm:$0xff]
    %v349 = vld [vmem:[#allocation8 + $0x108] sm:$0xff]
    %v350 = vld [vmem:[#allocation8 + $0x110] sm:$0xff]
    %v351 = vld [vmem:[#allocation8 + $0x118] sm:$0xff]
    %v352 = vld [vmem:[#allocation8 + $0x120] sm:$0xff]
    %v353 = vld [vmem:[#allocation8 + $0x128] sm:$0xff]
    %v354 = vld [vmem:[#allocation8 + $0x130] sm:$0xff]
    %v355 = vld [vmem:[#allocation8 + $0x138] sm:$0xff]
    %v356 = vld [vmem:[#allocation8 + $0x140] sm:$0xff]
    %v357 = vld [vmem:[#allocation8 + $0x148] sm:$0xff]
    %v358 = vld [vmem:[#allocation8 + $0x150] sm:$0xff]
    %v359 = vld [vmem:[#allocation8 + $0x158] sm:$0xff]
    %v360 = vld [vmem:[#allocation8 + $0x160] sm:$0xff]
    %v361 = vld [vmem:[#allocation8 + $0x168] sm:$0xff]
    %v362 = vld [vmem:[#allocation8 + $0x170] sm:$0xff]
    %v363 = vld [vmem:[#allocation8 + $0x178] sm:$0xff]
    %v364 = vld [vmem:[#allocation8 + $0x180] sm:$0xff]
    %v365 = vld [vmem:[#allocation8 + $0x188] sm:$0xff]
    %v366 = vld [vmem:[#allocation8 + $0x190] sm:$0xff]
    %v367 = vld [vmem:[#allocation8 + $0x198] sm:$0xff]
    %v368 = vld [vmem:[#allocation8 + $0x1a0] sm:$0xff]
    %v369 = vld [vmem:[#allocation8 + $0x1a8] sm:$0xff]
    %v370 = vld [vmem:[#allocation8 + $0x1b0] sm:$0xff]
    %v371 = vld [vmem:[#allocation8 + $0x1b8] sm:$0xff]
    %v372 = vld [vmem:[#allocation8 + $0x1c0] sm:$0xff]
    %v373 = vld [vmem:[#allocation8 + $0x1c8] sm:$0xff]
    %v374 = vld [vmem:[#allocation8 + $0x1d0] sm:$0xff]
    %v375 = vld [vmem:[#allocation8 + $0x1d8] sm:$0xff]
    %v376 = vld [vmem:[#allocation8 + $0x1e0] sm:$0xff]
    %v377 = vld [vmem:[#allocation8 + $0x1e8] sm:$0xff]
    %v378 = vld [vmem:[#allocation8 + $0x1f0] sm:$0xff]
    %v379 = vld [vmem:[#allocation8 + $0x1f8] sm:$0xff]
    %v380 = vld [vmem:[%s8] sm:$0x1]
    %v381 = vld [vmem:[%s6] sm:$0x3]
    %v382 = vld [vmem:[%s7] sm:$0x3]
    %383 = vmatprep.subr.mxu0 %v377
    %384 = vmatpush1.msra.mxu0 %v376
    %385 = vmatprep.subr.mxu0 %v373
    %386 = vmatpush1.msra.mxu0 %v372
    %387 = vmatprep.subr.mxu0 %v369
    %388 = vmatpush1.msra.mxu0 %v368
    %389 = vmatprep.subr.mxu0 %v365
    %390 = vmatpush1.msra.mxu0 %v364
    %391 = vmatprep.subr.mxu0 %v361
    %392 = vmatpush1.msra.mxu0 %v360
    %393 = vmatprep.subr.mxu0 %v357
    %394 = vmatpush1.msra.mxu0 %v356
    %395 = vmatprep.subr.mxu0 %v353
    %396 = vmatpush1.msra.mxu0 %v352
    %397 = vmatprep.subr.mxu0 %v349
    %398 = vmatpush1.msra.mxu0 %v348
    %399 = vmatprep.subr.mxu0 %v345
    %400 = vmatpush1.msra.mxu0 %v344
    %401 = vmatprep.subr.mxu0 %v341
    %402 = vmatpush1.msra.mxu0 %v340
    %403 = vmatprep.subr.mxu0 %v337
    %404 = vmatpush1.msra.mxu0 %v336
    %405 = vmatprep.subr.mxu0 %v333
    %406 = vmatpush1.msra.mxu0 %v332
    %407 = vmatprep.subr.mxu0 %v329
    %408 = vmatpush1.msra.mxu0 %v328
    %409 = vmatprep.subr.mxu0 %v325
    %410 = vmatpush1.msra.mxu0 %v324
    %411 = vmatprep.subr.mxu0 %v321
    %412 = vmatpush1.msra.mxu0 %v320
    %413 = vmatprep.subr.mxu0 %v317
    %414 = vmatpush1.msra.mxu0 %v316
    %415 = vmatprep.subr.mxu0 0.0
    %416 = vmatpush2.msra.mxu0 0.0
    %417 = vmatprep.subr.mxu0 0.0
    %418 = vmatpush2.msra.mxu0 0.0
    %419 = vmatprep.subr.mxu0 0.0
    %420 = vmatpush2.msra.mxu0 0.0
    %421 = vmatprep.subr.mxu0 0.0
    %422 = vmatpush2.msra.mxu0 0.0
    %423 = vmatprep.subr.mxu0 0.0
    %424 = vmatpush2.msra.mxu0 0.0
    %425 = vmatprep.subr.mxu0 0.0
    %426 = vmatpush2.msra.mxu0 0.0
    %427 = vmatprep.subr.mxu0 0.0
    %428 = vmatpush2.msra.mxu0 0.0
    %429 = vmatprep.subr.mxu0 0.0
    %430 = vmatpush2.msra.mxu0 0.0
    %431 = vmatprep.subr.mxu0 0.0
    %432 = vmatpush2.msra.mxu0 0.0
    %433 = vmatprep.subr.mxu0 0.0
    %434 = vmatpush2.msra.mxu0 0.0
    %435 = vmatprep.subr.mxu0 0.0
    %436 = vmatpush2.msra.mxu0 0.0
    %437 = vmatprep.subr.mxu0 0.0
    %438 = vmatpush2.msra.mxu0 0.0
    %439 = vmatprep.subr.mxu0 0.0
    %440 = vmatpush2.msra.mxu0 0.0
    %441 = vmatprep.subr.mxu0 0.0
    %442 = vmatpush2.msra.mxu0 0.0
    %443 = vmatprep.subr.mxu0 0.0
    %444 = vmatpush2.msra.mxu0 0.0
    %445 = vmatprep.subr.mxu0 0.0
    %446 = vmatpush2.msra.mxu0 0.0
    %447 = vmatprep.mubr.f32.mxu0 0.0
    %448 = vmatmul.mubr.f32.gmra.mxu0 %v381
    %v449 = vpop.f32.mrf.mxu0
    %v450 = vadd.f32 %v229, %v449
    %v451 = vpop.f32.mrf.mxu0
    %v452 = vadd.f32 %v231, %v451
    %453 = vdwg.mxu0
    %454 = vmatprep.subr.mxu0 %v379
    %455 = vmatpush1.msra.mxu0 %v378
    %456 = vmatprep.subr.mxu0 %v375
    %457 = vmatpush1.msra.mxu0 %v374
    %458 = vmatprep.subr.mxu0 %v371
    %459 = vmatpush1.msra.mxu0 %v370
    %460 = vmatprep.subr.mxu0 %v367
    %461 = vmatpush1.msra.mxu0 %v366
    %462 = vmatprep.subr.mxu0 %v363
    %463 = vmatpush1.msra.mxu0 %v362
    %464 = vmatprep.subr.mxu0 %v359
    %465 = vmatpush1.msra.mxu0 %v358
    %466 = vmatprep.subr.mxu0 %v355
    %467 = vmatpush1.msra.mxu0 %v354
    %468 = vmatprep.subr.mxu0 %v351
    %469 = vmatpush1.msra.mxu0 %v350
    %470 = vmatprep.subr.mxu0 %v347
    %471 = vmatpush1.msra.mxu0 %v346
    %472 = vmatprep.subr.mxu0 %v343
    %473 = vmatpush1.msra.mxu0 %v342
    %474 = vmatprep.subr.mxu0 %v339
    %475 = vmatpush1.msra.mxu0 %v338
    %476 = vmatprep.subr.mxu0 %v335
    %477 = vmatpush1.msra.mxu0 %v334
    %478 = vmatprep.subr.mxu0 %v331
    %479 = vmatpush1.msra.mxu0 %v330
    %480 = vmatprep.subr.mxu0 %v327
    %481 = vmatpush1.msra.mxu0 %v326
    %482 = vmatprep.subr.mxu0 %v323
    %483 = vmatpush1.msra.mxu0 %v322
    %484 = vmatprep.subr.mxu0 %v319
    %485 = vmatpush1.msra.mxu0 %v318
    %486 = vmatprep.subr.mxu0 0.0
    %487 = vmatpush2.msra.mxu0 0.0
    %488 = vmatprep.subr.mxu0 0.0
    %489 = vmatpush2.msra.mxu0 0.0
    %490 = vmatprep.subr.mxu0 0.0
    %491 = vmatpush2.msra.mxu0 0.0
    %492 = vmatprep.subr.mxu0 0.0
    %493 = vmatpush2.msra.mxu0 0.0
    %494 = vmatprep.subr.mxu0 0.0
    %495 = vmatpush2.msra.mxu0 0.0
    %496 = vmatprep.subr.mxu0 0.0
    %497 = vmatpush2.msra.mxu0 0.0
    %498 = vmatprep.subr.mxu0 0.0
    %499 = vmatpush2.msra.mxu0 0.0
    %500 = vmatprep.subr.mxu0 0.0
    %501 = vmatpush2.msra.mxu0 0.0
    %502 = vmatprep.subr.mxu0 0.0
    %503 = vmatpush2.msra.mxu0 0.0
    %504 = vmatprep.subr.mxu0 0.0
    %505 = vmatpush2.msra.mxu0 0.0
    %506 = vmatprep.subr.mxu0 0.0
    %507 = vmatpush2.msra.mxu0 0.0
    %508 = vmatprep.subr.mxu0 0.0
    %509 = vmatpush2.msra.mxu0 0.0
    %510 = vmatprep.subr.mxu0 0.0
    %511 = vmatpush2.msra.mxu0 0.0
    %512 = vmatprep.subr.mxu0 0.0
    %513 = vmatpush2.msra.mxu0 0.0
    %514 = vmatprep.subr.mxu0 0.0
    %515 = vmatpush2.msra.mxu0 0.0
    %516 = vmatprep.subr.mxu0 0.0
    %517 = vmatpush2.msra.mxu0 0.0
    %518 = vmatprep.mubr.f32.mxu0 0.0
    %519 = vmatmul.mubr.f32.gmra.mxu0 %v381
    %v520 = vpop.f32.mrf.mxu0
    %v521 = vadd.f32 %v306, %v520
    %v522 = vpop.f32.mrf.mxu0
    %v523 = vadd.f32 %v308, %v522
    %524 = vdwg.mxu0
    %v525 = vxor.u32 %v450, 2147483648
    %v526 = vxor.u32 %v452, 2147483648
    %v527 = vxor.u32 %v521, 2147483648
    %v528 = vmul.f32 %v525, 1.442695
    %v529 = vpow.pop %v528
    %v530 = vmul.f32 %v526, 1.442695
    %v531 = vpow.pop %v530
    %v532 = vmul.f32 %v527, 1.442695
    %v533 = vpow.pop %v532
    %v534 = vadd.f32 %v529, 1.0
    %v535 = vadd.f32 %v531, 1.0
    %v536 = vadd.f32 %v533, 1.0
    %v537 = vrcp.pop %v534
    %v538 = vmul.f32 1.0, %v537
    %v539 = vrcp.pop %v535
    %v540 = vmul.f32 1.0, %v539
    %v541 = vrcp.pop %v536
    %v542 = vmul.f32 1.0, %v541
    %v543 = vtanh.pop %v523
    %v544 = vmul.f32 %v540, %v382
    %v545 = vmul.f32 %v538, %v543
    %v546 = vadd.f32 %v544, %v545
    %v547 = vtanh.pop %v546
    %v548 = vmul.f32 %v542, %v547
    %v549 = vsub.f32 %v548, %v381
    %v551 = vlaneseq
    %v552 = vshrl.u32 %v551, 7
    %v553 = vsub.s32 0, %v552
    %v554 = vrot.slane %v380, %v553
    %v556 = vmul.f32 %v549, %v554
    %v557 = vadd.f32 %v381, %v556
    %v558 = vsub.f32 %v546, %v382
    %v559 = vmul.f32 %v558, %v554
    %v560 = vadd.f32 %v382, %v559
    %v565 = vrot.slane %v229, 2
    %v566 = vrot.slane %v231, 2
    %v567 = vrot.slane %v306, 2
    %v568 = vrot.slane %v308, 2
    %573 = vmatprep.subr.mxu0 %v377
    %574 = vmatpush1.msra.mxu0 %v376
    %575 = vmatprep.subr.mxu0 %v373
    %576 = vmatpush1.msra.mxu0 %v372
    %577 = vmatprep.subr.mxu0 %v369
    %578 = vmatpush1.msra.mxu0 %v368
    %579 = vmatprep.subr.mxu0 %v365
    %580 = vmatpush1.msra.mxu0 %v364
    %581 = vmatprep.subr.mxu0 %v361
    %582 = vmatpush1.msra.mxu0 %v360
    %583 = vmatprep.subr.mxu0 %v357
    %584 = vmatpush1.msra.mxu0 %v356
    %585 = vmatprep.subr.mxu0 %v353
    %586 = vmatpush1.msra.mxu0 %v352
    %587 = vmatprep.subr.mxu0 %v349
    %588 = vmatpush1.msra.mxu0 %v348
    %589 = vmatprep.subr.mxu0 %v345
    %590 = vmatpush1.msra.mxu0 %v344
    %591 = vmatprep.subr.mxu0 %v341
    %592 = vmatpush1.msra.mxu0 %v340
    %593 = vmatprep.subr.mxu0 %v337
    %594 = vmatpush1.msra.mxu0 %v336
    %595 = vmatprep.subr.mxu0 %v333
    %596 = vmatpush1.msra.mxu0 %v332
    %597 = vmatprep.subr.mxu0 %v329
    %598 = vmatpush1.msra.mxu0 %v328
    %599 = vmatprep.subr.mxu0 %v325
    %600 = vmatpush1.msra.mxu0 %v324
    %601 = vmatprep.subr.mxu0 %v321
    %602 = vmatpush1.msra.mxu0 %v320
    %603 = vmatprep.subr.mxu0 %v317
    %604 = vmatpush1.msra.mxu0 %v316
    %605 = vmatprep.subr.mxu0 0.0
    %606 = vmatpush2.msra.mxu0 0.0
    %607 = vmatprep.subr.mxu0 0.0
    %608 = vmatpush2.msra.mxu0 0.0
    %609 = vmatprep.subr.mxu0 0.0
    %610 = vmatpush2.msra.mxu0 0.0
    %611 = vmatprep.subr.mxu0 0.0
    %612 = vmatpush2.msra.mxu0 0.0
    %613 = vmatprep.subr.mxu0 0.0
    %614 = vmatpush2.msra.mxu0 0.0
    %615 = vmatprep.subr.mxu0 0.0
    %616 = vmatpush2.msra.mxu0 0.0
    %617 = vmatprep.subr.mxu0 0.0
    %618 = vmatpush2.msra.mxu0 0.0
    %619 = vmatprep.subr.mxu0 0.0
    %620 = vmatpush2.msra.mxu0 0.0
    %621 = vmatprep.subr.mxu0 0.0
    %622 = vmatpush2.msra.mxu0 0.0
    %623 = vmatprep.subr.mxu0 0.0
    %624 = vmatpush2.msra.mxu0 0.0
    %625 = vmatprep.subr.mxu0 0.0
    %626 = vmatpush2.msra.mxu0 0.0
    %627 = vmatprep.subr.mxu0 0.0
    %628 = vmatpush2.msra.mxu0 0.0
    %629 = vmatprep.subr.mxu0 0.0
    %630 = vmatpush2.msra.mxu0 0.0
    %631 = vmatprep.subr.mxu0 0.0
    %632 = vmatpush2.msra.mxu0 0.0
    %633 = vmatprep.subr.mxu0 0.0
    %634 = vmatpush2.msra.mxu0 0.0
    %635 = vmatprep.subr.mxu0 0.0
    %636 = vmatpush2.msra.mxu0 0.0
    %637 = vmatprep.mubr.f32.mxu0 0.0
    %638 = vmatmul.mubr.f32.gmra.mxu0 %v557
    %v639 = vpop.f32.mrf.mxu0
    %v640 = vadd.f32 %v565, %v639
    %v641 = vpop.f32.mrf.mxu0
    %v642 = vadd.f32 %v566, %v641
    %643 = vdwg.mxu0
    %644 = vmatprep.subr.mxu0 %v379
    %645 = vmatpush1.msra.mxu0 %v378
    %646 = vmatprep.subr.mxu0 %v375
    %647 = vmatpush1.msra.mxu0 %v374
    %648 = vmatprep.subr.mxu0 %v371
    %649 = vmatpush1.msra.mxu0 %v370
    %650 = vmatprep.subr.mxu0 %v367
    %651 = vmatpush1.msra.mxu0 %v366
    %652 = vmatprep.subr.mxu0 %v363
    %653 = vmatpush1.msra.mxu0 %v362
    %654 = vmatprep.subr.mxu0 %v359
    %655 = vmatpush1.msra.mxu0 %v358
    %656 = vmatprep.subr.mxu0 %v355
    %657 = vmatpush1.msra.mxu0 %v354
    %658 = vmatprep.subr.mxu0 %v351
    %659 = vmatpush1.msra.mxu0 %v350
    %660 = vmatprep.subr.mxu0 %v347
    %661 = vmatpush1.msra.mxu0 %v346
    %662 = vmatprep.subr.mxu0 %v343
    %663 = vmatpush1.msra.mxu0 %v342
    %664 = vmatprep.subr.mxu0 %v339
    %665 = vmatpush1.msra.mxu0 %v338
    %666 = vmatprep.subr.mxu0 %v335
    %667 = vmatpush1.msra.mxu0 %v334
    %668 = vmatprep.subr.mxu0 %v331
    %669 = vmatpush1.msra.mxu0 %v330
    %670 = vmatprep.subr.mxu0 %v327
    %671 = vmatpush1.msra.mxu0 %v326
    %672 = vmatprep.subr.mxu0 %v323
    %673 = vmatpush1.msra.mxu0 %v322
    %674 = vmatprep.subr.mxu0 %v319
    %675 = vmatpush1.msra.mxu0 %v318
    %676 = vmatprep.subr.mxu0 0.0
    %677 = vmatpush2.msra.mxu0 0.0
    %678 = vmatprep.subr.mxu0 0.0
    %679 = vmatpush2.msra.mxu0 0.0
    %680 = vmatprep.subr.mxu0 0.0
    %681 = vmatpush2.msra.mxu0 0.0
    %682 = vmatprep.subr.mxu0 0.0
    %683 = vmatpush2.msra.mxu0 0.0
    %684 = vmatprep.subr.mxu0 0.0
    %685 = vmatpush2.msra.mxu0 0.0
    %686 = vmatprep.subr.mxu0 0.0
    %687 = vmatpush2.msra.mxu0 0.0
    %688 = vmatprep.subr.mxu0 0.0
    %689 = vmatpush2.msra.mxu0 0.0
    %690 = vmatprep.subr.mxu0 0.0
    %691 = vmatpush2.msra.mxu0 0.0
    %692 = vmatprep.subr.mxu0 0.0
    %693 = vmatpush2.msra.mxu0 0.0
    %694 = vmatprep.subr.mxu0 0.0
    %695 = vmatpush2.msra.mxu0 0.0
    %696 = vmatprep.subr.mxu0 0.0
    %697 = vmatpush2.msra.mxu0 0.0
    %698 = vmatprep.subr.mxu0 0.0
    %699 = vmatpush2.msra.mxu0 0.0
    %700 = vmatprep.subr.mxu0 0.0
    %701 = vmatpush2.msra.mxu0 0.0
    %702 = vmatprep.subr.mxu0 0.0
    %703 = vmatpush2.msra.mxu0 0.0
    %704 = vmatprep.subr.mxu0 0.0
    %705 = vmatpush2.msra.mxu0 0.0
    %706 = vmatprep.subr.mxu0 0.0
    %707 = vmatpush2.msra.mxu0 0.0
    %708 = vmatprep.mubr.f32.mxu0 0.0
    %709 = vmatmul.mubr.f32.gmra.mxu0 %v557
    %v710 = vpop.f32.mrf.mxu0
    %v711 = vadd.f32 %v567, %v710
    %v712 = vpop.f32.mrf.mxu0
    %v713 = vadd.f32 %v568, %v712
    %714 = vdwg.mxu0
    %v715 = vxor.u32 %v640, 2147483648
    %v716 = vxor.u32 %v642, 2147483648
    %v717 = vxor.u32 %v711, 2147483648
    %v718 = vmul.f32 %v715, 1.442695
    %v719 = vpow.pop %v718
    %v720 = vmul.f32 %v716, 1.442695
    %v721 = vpow.pop %v720
    %v722 = vmul.f32 %v717, 1.442695
    %v723 = vpow.pop %v722
    %v724 = vadd.f32 %v719, 1.0
    %v725 = vadd.f32 %v721, 1.0
    %v726 = vadd.f32 %v723, 1.0
    %v727 = vrcp.pop %v724
    %v728 = vmul.f32 1.0, %v727
    %v729 = vrcp.pop %v725
    %v730 = vmul.f32 1.0, %v729
    %v731 = vrcp.pop %v726
    %v732 = vmul.f32 1.0, %v731
    %v733 = vtanh.pop %v713
    %v734 = vmul.f32 %v730, %v560
    %v735 = vmul.f32 %v728, %v733
    %v736 = vadd.f32 %v734, %v735
    %v737 = vtanh.pop %v736
    %v738 = vmul.f32 %v732, %v737
    %v739 = vrot.slane %v229, 4
    %v740 = vrot.slane %v231, 4
    %v741 = vrot.slane %v306, 4
    %v742 = vrot.slane %v308, 4
    %747 = vmatprep.subr.mxu0 %v377
    %748 = vmatpush1.msra.mxu0 %v376
    %749 = vmatprep.subr.mxu0 %v373
    %750 = vmatpush1.msra.mxu0 %v372
    %751 = vmatprep.subr.mxu0 %v369
    %752 = vmatpush1.msra.mxu0 %v368
    %753 = vmatprep.subr.mxu0 %v365
    %754 = vmatpush1.msra.mxu0 %v364
    %755 = vmatprep.subr.mxu0 %v361
    %756 = vmatpush1.msra.mxu0 %v360
    %757 = vmatprep.subr.mxu0 %v357
    %758 = vmatpush1.msra.mxu0 %v356
    %759 = vmatprep.subr.mxu0 %v353
    %760 = vmatpush1.msra.mxu0 %v352
    %761 = vmatprep.subr.mxu0 %v349
    %762 = vmatpush1.msra.mxu0 %v348
    %763 = vmatprep.subr.mxu0 %v345
    %764 = vmatpush1.msra.mxu0 %v344
    %765 = vmatprep.subr.mxu0 %v341
    %766 = vmatpush1.msra.mxu0 %v340
    %767 = vmatprep.subr.mxu0 %v337
    %768 = vmatpush1.msra.mxu0 %v336
    %769 = vmatprep.subr.mxu0 %v333
    %770 = vmatpush1.msra.mxu0 %v332
    %771 = vmatprep.subr.mxu0 %v329
    %772 = vmatpush1.msra.mxu0 %v328
    %773 = vmatprep.subr.mxu0 %v325
    %774 = vmatpush1.msra.mxu0 %v324
    %775 = vmatprep.subr.mxu0 %v321
    %776 = vmatpush1.msra.mxu0 %v320
    %777 = vmatprep.subr.mxu0 %v317
    %778 = vmatpush1.msra.mxu0 %v316
    %779 = vmatprep.subr.mxu0 0.0
    %780 = vmatpush2.msra.mxu0 0.0
    %781 = vmatprep.subr.mxu0 0.0
    %782 = vmatpush2.msra.mxu0 0.0
    %783 = vmatprep.subr.mxu0 0.0
    %784 = vmatpush2.msra.mxu0 0.0
    %785 = vmatprep.subr.mxu0 0.0
    %786 = vmatpush2.msra.mxu0 0.0
    %787 = vmatprep.subr.mxu0 0.0
    %788 = vmatpush2.msra.mxu0 0.0
    %789 = vmatprep.subr.mxu0 0.0
    %790 = vmatpush2.msra.mxu0 0.0
    %791 = vmatprep.subr.mxu0 0.0
    %792 = vmatpush2.msra.mxu0 0.0
    %793 = vmatprep.subr.mxu0 0.0
    %794 = vmatpush2.msra.mxu0 0.0
    %795 = vmatprep.subr.mxu0 0.0
    %796 = vmatpush2.msra.mxu0 0.0
    %797 = vmatprep.subr.mxu0 0.0
    %798 = vmatpush2.msra.mxu0 0.0
    %799 = vmatprep.subr.mxu0 0.0
    %800 = vmatpush2.msra.mxu0 0.0
    %801 = vmatprep.subr.mxu0 0.0
    %802 = vmatpush2.msra.mxu0 0.0
    %803 = vmatprep.subr.mxu0 0.0
    %804 = vmatpush2.msra.mxu0 0.0
    %805 = vmatprep.subr.mxu0 0.0
    %806 = vmatpush2.msra.mxu0 0.0
    %807 = vmatprep.subr.mxu0 0.0
    %808 = vmatpush2.msra.mxu0 0.0
    %809 = vmatprep.subr.mxu0 0.0
    %810 = vmatpush2.msra.mxu0 0.0
    %811 = vmatprep.mubr.f32.mxu0 0.0
    %812 = vmatmul.mubr.f32.gmra.mxu0 %v738
    %v813 = vpop.f32.mrf.mxu0
    %v814 = vadd.f32 %v739, %v813
    %v815 = vpop.f32.mrf.mxu0
    %v816 = vadd.f32 %v740, %v815
    %817 = vdwg.mxu0
    %818 = vmatprep.subr.mxu0 %v379
    %819 = vmatpush1.msra.mxu0 %v378
    %820 = vmatprep.subr.mxu0 %v375
    %821 = vmatpush1.msra.mxu0 %v374
    %822 = vmatprep.subr.mxu0 %v371
    %823 = vmatpush1.msra.mxu0 %v370
    %824 = vmatprep.subr.mxu0 %v367
    %825 = vmatpush1.msra.mxu0 %v366
    %826 = vmatprep.subr.mxu0 %v363
    %827 = vmatpush1.msra.mxu0 %v362
    %828 = vmatprep.subr.mxu0 %v359
    %829 = vmatpush1.msra.mxu0 %v358
    %830 = vmatprep.subr.mxu0 %v355
    %831 = vmatpush1.msra.mxu0 %v354
    %832 = vmatprep.subr.mxu0 %v351
    %833 = vmatpush1.msra.mxu0 %v350
    %834 = vmatprep.subr.mxu0 %v347
    %835 = vmatpush1.msra.mxu0 %v346
    %836 = vmatprep.subr.mxu0 %v343
    %837 = vmatpush1.msra.mxu0 %v342
    %838 = vmatprep.subr.mxu0 %v339
    %839 = vmatpush1.msra.mxu0 %v338
    %840 = vmatprep.subr.mxu0 %v335
    %841 = vmatpush1.msra.mxu0 %v334
    %842 = vmatprep.subr.mxu0 %v331
    %843 = vmatpush1.msra.mxu0 %v330
    %844 = vmatprep.subr.mxu0 %v327
    %845 = vmatpush1.msra.mxu0 %v326
    %846 = vmatprep.subr.mxu0 %v323
    %847 = vmatpush1.msra.mxu0 %v322
    %848 = vmatprep.subr.mxu0 %v319
    %849 = vmatpush1.msra.mxu0 %v318
    %850 = vmatprep.subr.mxu0 0.0
    %851 = vmatpush2.msra.mxu0 0.0
    %852 = vmatprep.subr.mxu0 0.0
    %853 = vmatpush2.msra.mxu0 0.0
    %854 = vmatprep.subr.mxu0 0.0
    %855 = vmatpush2.msra.mxu0 0.0
    %856 = vmatprep.subr.mxu0 0.0
    %857 = vmatpush2.msra.mxu0 0.0
    %858 = vmatprep.subr.mxu0 0.0
    %859 = vmatpush2.msra.mxu0 0.0
    %860 = vmatprep.subr.mxu0 0.0
    %861 = vmatpush2.msra.mxu0 0.0
    %862 = vmatprep.subr.mxu0 0.0
    %863 = vmatpush2.msra.mxu0 0.0
    %864 = vmatprep.subr.mxu0 0.0
    %865 = vmatpush2.msra.mxu0 0.0
    %866 = vmatprep.subr.mxu0 0.0
    %867 = vmatpush2.msra.mxu0 0.0
    %868 = vmatprep.subr.mxu0 0.0
    %869 = vmatpush2.msra.mxu0 0.0
    %870 = vmatprep.subr.mxu0 0.0
    %871 = vmatpush2.msra.mxu0 0.0
    %872 = vmatprep.subr.mxu0 0.0
    %873 = vmatpush2.msra.mxu0 0.0
    %874 = vmatprep.subr.mxu0 0.0
    %875 = vmatpush2.msra.mxu0 0.0
    %876 = vmatprep.subr.mxu0 0.0
    %877 = vmatpush2.msra.mxu0 0.0
    %878 = vmatprep.subr.mxu0 0.0
    %879 = vmatpush2.msra.mxu0 0.0
    %880 = vmatprep.subr.mxu0 0.0
    %881 = vmatpush2.msra.mxu0 0.0
    %882 = vmatprep.mubr.f32.mxu0 0.0
    %883 = vmatmul.mubr.f32.gmra.mxu0 %v738
    %v884 = vpop.f32.mrf.mxu0
    %v885 = vadd.f32 %v741, %v884
    %v886 = vpop.f32.mrf.mxu0
    %v887 = vadd.f32 %v742, %v886
    %888 = vdwg.mxu0
    %v889 = vxor.u32 %v814, 2147483648
    %v890 = vxor.u32 %v816, 2147483648
    %v891 = vxor.u32 %v885, 2147483648
    %v892 = vmul.f32 %v889, 1.442695
    %v893 = vpow.pop %v892
    %v894 = vmul.f32 %v890, 1.442695
    %v895 = vpow.pop %v894
    %v896 = vmul.f32 %v891, 1.442695
    %v897 = vpow.pop %v896
    %v898 = vadd.f32 %v893, 1.0
    %v899 = vadd.f32 %v895, 1.0
    %v900 = vadd.f32 %v897, 1.0
    %v901 = vrcp.pop %v898
    %v902 = vmul.f32 1.0, %v901
    %v903 = vrcp.pop %v899
    %v904 = vmul.f32 1.0, %v903
    %v905 = vrcp.pop %v900
    %v906 = vmul.f32 1.0, %v905
    %v907 = vtanh.pop %v887
    %v908 = vmul.f32 %v904, %v736
    %v909 = vmul.f32 %v902, %v907
    %v910 = vadd.f32 %v908, %v909
    %v911 = vtanh.pop %v910
    %v912 = vmul.f32 %v906, %v911
    %v913 = vrot.slane %v229, 6
    %v914 = vrot.slane %v231, 6
    %v915 = vrot.slane %v306, 6
    %v916 = vrot.slane %v308, 6
    %921 = vmatprep.subr.mxu0 %v377
    %922 = vmatpush1.msra.mxu0 %v376
    %923 = vmatprep.subr.mxu0 %v373
    %924 = vmatpush1.msra.mxu0 %v372
    %925 = vmatprep.subr.mxu0 %v369
    %926 = vmatpush1.msra.mxu0 %v368
    %927 = vmatprep.subr.mxu0 %v365
    %928 = vmatpush1.msra.mxu0 %v364
    %929 = vmatprep.subr.mxu0 %v361
    %930 = vmatpush1.msra.mxu0 %v360
    %931 = vmatprep.subr.mxu0 %v357
    %932 = vmatpush1.msra.mxu0 %v356
    %933 = vmatprep.subr.mxu0 %v353
    %934 = vmatpush1.msra.mxu0 %v352
    %935 = vmatprep.subr.mxu0 %v349
    %936 = vmatpush1.msra.mxu0 %v348
    %937 = vmatprep.subr.mxu0 %v345
    %938 = vmatpush1.msra.mxu0 %v344
    %939 = vmatprep.subr.mxu0 %v341
    %940 = vmatpush1.msra.mxu0 %v340
    %941 = vmatprep.subr.mxu0 %v337
    %942 = vmatpush1.msra.mxu0 %v336
    %943 = vmatprep.subr.mxu0 %v333
    %944 = vmatpush1.msra.mxu0 %v332
    %945 = vmatprep.subr.mxu0 %v329
    %946 = vmatpush1.msra.mxu0 %v328
    %947 = vmatprep.subr.mxu0 %v325
    %948 = vmatpush1.msra.mxu0 %v324
    %949 = vmatprep.subr.mxu0 %v321
    %950 = vmatpush1.msra.mxu0 %v320
    %951 = vmatprep.subr.mxu0 %v317
    %952 = vmatpush1.msra.mxu0 %v316
    %953 = vmatprep.subr.mxu0 0.0
    %954 = vmatpush2.msra.mxu0 0.0
    %955 = vmatprep.subr.mxu0 0.0
    %956 = vmatpush2.msra.mxu0 0.0
    %957 = vmatprep.subr.mxu0 0.0
    %958 = vmatpush2.msra.mxu0 0.0
    %959 = vmatprep.subr.mxu0 0.0
    %960 = vmatpush2.msra.mxu0 0.0
    %961 = vmatprep.subr.mxu0 0.0
    %962 = vmatpush2.msra.mxu0 0.0
    %963 = vmatprep.subr.mxu0 0.0
    %964 = vmatpush2.msra.mxu0 0.0
    %965 = vmatprep.subr.mxu0 0.0
    %966 = vmatpush2.msra.mxu0 0.0
    %967 = vmatprep.subr.mxu0 0.0
    %968 = vmatpush2.msra.mxu0 0.0
    %969 = vmatprep.subr.mxu0 0.0
    %970 = vmatpush2.msra.mxu0 0.0
    %971 = vmatprep.subr.mxu0 0.0
    %972 = vmatpush2.msra.mxu0 0.0
    %973 = vmatprep.subr.mxu0 0.0
    %974 = vmatpush2.msra.mxu0 0.0
    %975 = vmatprep.subr.mxu0 0.0
    %976 = vmatpush2.msra.mxu0 0.0
    %977 = vmatprep.subr.mxu0 0.0
    %978 = vmatpush2.msra.mxu0 0.0
    %979 = vmatprep.subr.mxu0 0.0
    %980 = vmatpush2.msra.mxu0 0.0
    %981 = vmatprep.subr.mxu0 0.0
    %982 = vmatpush2.msra.mxu0 0.0
    %983 = vmatprep.subr.mxu0 0.0
    %984 = vmatpush2.msra.mxu0 0.0
    %985 = vmatprep.mubr.f32.mxu0 0.0
    %986 = vmatmul.mubr.f32.gmra.mxu0 %v912
    %v987 = vpop.f32.mrf.mxu0
    %v988 = vadd.f32 %v913, %v987
    %v989 = vpop.f32.mrf.mxu0
    %v990 = vadd.f32 %v914, %v989
    %991 = vdwg.mxu0
    %992 = vmatprep.subr.mxu0 %v379
    %993 = vmatpush1.msra.mxu0 %v378
    %994 = vmatprep.subr.mxu0 %v375
    %995 = vmatpush1.msra.mxu0 %v374
    %996 = vmatprep.subr.mxu0 %v371
    %997 = vmatpush1.msra.mxu0 %v370
    %998 = vmatprep.subr.mxu0 %v367
    %999 = vmatpush1.msra.mxu0 %v366
    %1000 = vmatprep.subr.mxu0 %v363
    %1001 = vmatpush1.msra.mxu0 %v362
    %1002 = vmatprep.subr.mxu0 %v359
    %1003 = vmatpush1.msra.mxu0 %v358
    %1004 = vmatprep.subr.mxu0 %v355
    %1005 = vmatpush1.msra.mxu0 %v354
    %1006 = vmatprep.subr.mxu0 %v351
    %1007 = vmatpush1.msra.mxu0 %v350
    %1008 = vmatprep.subr.mxu0 %v347
    %1009 = vmatpush1.msra.mxu0 %v346
    %1010 = vmatprep.subr.mxu0 %v343
    %1011 = vmatpush1.msra.mxu0 %v342
    %1012 = vmatprep.subr.mxu0 %v339
    %1013 = vmatpush1.msra.mxu0 %v338
    %1014 = vmatprep.subr.mxu0 %v335
    %1015 = vmatpush1.msra.mxu0 %v334
    %1016 = vmatprep.subr.mxu0 %v331
    %1017 = vmatpush1.msra.mxu0 %v330
    %1018 = vmatprep.subr.mxu0 %v327
    %1019 = vmatpush1.msra.mxu0 %v326
    %1020 = vmatprep.subr.mxu0 %v323
    %1021 = vmatpush1.msra.mxu0 %v322
    %1022 = vmatprep.subr.mxu0 %v319
    %1023 = vmatpush1.msra.mxu0 %v318
    %1024 = vmatprep.subr.mxu0 0.0
    %1025 = vmatpush2.msra.mxu0 0.0
    %1026 = vmatprep.subr.mxu0 0.0
    %1027 = vmatpush2.msra.mxu0 0.0
    %1028 = vmatprep.subr.mxu0 0.0
    %1029 = vmatpush2.msra.mxu0 0.0
    %1030 = vmatprep.subr.mxu0 0.0
    %1031 = vmatpush2.msra.mxu0 0.0
    %1032 = vmatprep.subr.mxu0 0.0
    %1033 = vmatpush2.msra.mxu0 0.0
    %1034 = vmatprep.subr.mxu0 0.0
    %1035 = vmatpush2.msra.mxu0 0.0
    %1036 = vmatprep.subr.mxu0 0.0
    %1037 = vmatpush2.msra.mxu0 0.0
    %1038 = vmatprep.subr.mxu0 0.0
    %1039 = vmatpush2.msra.mxu0 0.0
    %1040 = vmatprep.subr.mxu0 0.0
    %1041 = vmatpush2.msra.mxu0 0.0
    %1042 = vmatprep.subr.mxu0 0.0
    %1043 = vmatpush2.msra.mxu0 0.0
    %1044 = vmatprep.subr.mxu0 0.0
    %1045 = vmatpush2.msra.mxu0 0.0
    %1046 = vmatprep.subr.mxu0 0.0
    %1047 = vmatpush2.msra.mxu0 0.0
    %1048 = vmatprep.subr.mxu0 0.0
    %1049 = vmatpush2.msra.mxu0 0.0
    %1050 = vmatprep.subr.mxu0 0.0
    %1051 = vmatpush2.msra.mxu0 0.0
    %1052 = vmatprep.subr.mxu0 0.0
    %1053 = vmatpush2.msra.mxu0 0.0
    %1054 = vmatprep.subr.mxu0 0.0
    %1055 = vmatpush2.msra.mxu0 0.0
    %1056 = vmatprep.mubr.f32.mxu0 0.0
    %1057 = vmatmul.mubr.f32.gmra.mxu0 %v912
    %v1058 = vpop.f32.mrf.mxu0
    %v1059 = vadd.f32 %v915, %v1058
    %v1060 = vpop.f32.mrf.mxu0
    %v1061 = vadd.f32 %v916, %v1060
    %1062 = vdwg.mxu0
    %v1063 = vxor.u32 %v988, 2147483648
    %v1064 = vxor.u32 %v990, 2147483648
    %v1065 = vxor.u32 %v1059, 2147483648
    %v1066 = vmul.f32 %v1063, 1.442695
    %v1067 = vpow.pop %v1066
    %v1068 = vmul.f32 %v1064, 1.442695
    %v1069 = vpow.pop %v1068
    %v1070 = vmul.f32 %v1065, 1.442695
    %v1071 = vpow.pop %v1070
    %v1072 = vadd.f32 %v1067, 1.0
    %v1073 = vadd.f32 %v1069, 1.0
    %v1074 = vadd.f32 %v1071, 1.0
    %v1075 = vrcp.pop %v1072
    %v1076 = vmul.f32 1.0, %v1075
    %v1077 = vrcp.pop %v1073
    %v1078 = vmul.f32 1.0, %v1077
    %v1079 = vrcp.pop %v1074
    %v1080 = vmul.f32 1.0, %v1079
    %v1081 = vtanh.pop %v1061
    %v1082 = vmul.f32 %v1078, %v910
    %v1083 = vmul.f32 %v1076, %v1081
    %v1084 = vadd.f32 %v1082, %v1083
    %v1085 = vtanh.pop %v1084
    %v1086 = vmul.f32 %v1080, %v1085
    %1087 = vmatprep.subr.mxu0 %v377
    %1088 = vmatpush1.msra.mxu0 %v376
    %1089 = vmatprep.subr.mxu0 %v373
    %1090 = vmatpush1.msra.mxu0 %v372
    %1091 = vmatprep.subr.mxu0 %v369
    %1092 = vmatpush1.msra.mxu0 %v368
    %1093 = vmatprep.subr.mxu0 %v365
    %1094 = vmatpush1.msra.mxu0 %v364
    %1095 = vmatprep.subr.mxu0 %v361
    %1096 = vmatpush1.msra.mxu0 %v360
    %1097 = vmatprep.subr.mxu0 %v357
    %1098 = vmatpush1.msra.mxu0 %v356
    %1099 = vmatprep.subr.mxu0 %v353
    %1100 = vmatpush1.msra.mxu0 %v352
    %1101 = vmatprep.subr.mxu0 %v349
    %1102 = vmatpush1.msra.mxu0 %v348
    %1103 = vmatprep.subr.mxu0 %v345
    %1104 = vmatpush1.msra.mxu0 %v344
    %1105 = vmatprep.subr.mxu0 %v341
    %1106 = vmatpush1.msra.mxu0 %v340
    %1107 = vmatprep.subr.mxu0 %v337
    %1108 = vmatpush1.msra.mxu0 %v336
    %1109 = vmatprep.subr.mxu0 %v333
    %1110 = vmatpush1.msra.mxu0 %v332
    %1111 = vmatprep.subr.mxu0 %v329
    %1112 = vmatpush1.msra.mxu0 %v328
    %1113 = vmatprep.subr.mxu0 %v325
    %1114 = vmatpush1.msra.mxu0 %v324
    %1115 = vmatprep.subr.mxu0 %v321
    %1116 = vmatpush1.msra.mxu0 %v320
    %1117 = vmatprep.subr.mxu0 %v317
    %1118 = vmatpush1.msra.mxu0 %v316
    %1119 = vmatprep.subr.mxu0 0.0
    %1120 = vmatpush2.msra.mxu0 0.0
    %1121 = vmatprep.subr.mxu0 0.0
    %1122 = vmatpush2.msra.mxu0 0.0
    %1123 = vmatprep.subr.mxu0 0.0
    %1124 = vmatpush2.msra.mxu0 0.0
    %1125 = vmatprep.subr.mxu0 0.0
    %1126 = vmatpush2.msra.mxu0 0.0
    %1127 = vmatprep.subr.mxu0 0.0
    %1128 = vmatpush2.msra.mxu0 0.0
    %1129 = vmatprep.subr.mxu0 0.0
    %1130 = vmatpush2.msra.mxu0 0.0
    %1131 = vmatprep.subr.mxu0 0.0
    %1132 = vmatpush2.msra.mxu0 0.0
    %1133 = vmatprep.subr.mxu0 0.0
    %1134 = vmatpush2.msra.mxu0 0.0
    %1135 = vmatprep.subr.mxu0 0.0
    %1136 = vmatpush2.msra.mxu0 0.0
    %1137 = vmatprep.subr.mxu0 0.0
    %1138 = vmatpush2.msra.mxu0 0.0
    %1139 = vmatprep.subr.mxu0 0.0
    %1140 = vmatpush2.msra.mxu0 0.0
    %1141 = vmatprep.subr.mxu0 0.0
    %1142 = vmatpush2.msra.mxu0 0.0
    %1143 = vmatprep.subr.mxu0 0.0
    %1144 = vmatpush2.msra.mxu0 0.0
    %1145 = vmatprep.subr.mxu0 0.0
    %1146 = vmatpush2.msra.mxu0 0.0
    %1147 = vmatprep.subr.mxu0 0.0
    %1148 = vmatpush2.msra.mxu0 0.0
    %1149 = vmatprep.subr.mxu0 0.0
    %1150 = vmatpush2.msra.mxu0 0.0
    %1151 = vmatprep.mubr.f32.mxu0 0.0
    %1152 = vmatmul.mubr.f32.gmra.mxu0 %v1086
    %v1153 = vpop.f32.mrf.mxu0
    %v1154 = vadd.f32 %v235, %v1153
    %v1155 = vpop.f32.mrf.mxu0
    %v1156 = vadd.f32 %v237, %v1155
    %1157 = vdwg.mxu0
    %1158 = vmatprep.subr.mxu0 %v379
    %1159 = vmatpush1.msra.mxu0 %v378
    %1160 = vmatprep.subr.mxu0 %v375
    %1161 = vmatpush1.msra.mxu0 %v374
    %1162 = vmatprep.subr.mxu0 %v371
    %1163 = vmatpush1.msra.mxu0 %v370
    %1164 = vmatprep.subr.mxu0 %v367
    %1165 = vmatpush1.msra.mxu0 %v366
    %1166 = vmatprep.subr.mxu0 %v363
    %1167 = vmatpush1.msra.mxu0 %v362
    %1168 = vmatprep.subr.mxu0 %v359
    %1169 = vmatpush1.msra.mxu0 %v358
    %1170 = vmatprep.subr.mxu0 %v355
    %1171 = vmatpush1.msra.mxu0 %v354
    %1172 = vmatprep.subr.mxu0 %v351
    %1173 = vmatpush1.msra.mxu0 %v350
    %1174 = vmatprep.subr.mxu0 %v347
    %1175 = vmatpush1.msra.mxu0 %v346
    %1176 = vmatprep.subr.mxu0 %v343
    %1177 = vmatpush1.msra.mxu0 %v342
    %1178 = vmatprep.subr.mxu0 %v339
    %1179 = vmatpush1.msra.mxu0 %v338
    %1180 = vmatprep.subr.mxu0 %v335
    %1181 = vmatpush1.msra.mxu0 %v334
    %1182 = vmatprep.subr.mxu0 %v331
    %1183 = vmatpush1.msra.mxu0 %v330
    %1184 = vmatprep.subr.mxu0 %v327
    %1185 = vmatpush1.msra.mxu0 %v326
    %1186 = vmatprep.subr.mxu0 %v323
    %1187 = vmatpush1.msra.mxu0 %v322
    %1188 = vmatprep.subr.mxu0 %v319
    %1189 = vmatpush1.msra.mxu0 %v318
    %1190 = vmatprep.subr.mxu0 0.0
    %1191 = vmatpush2.msra.mxu0 0.0
    %1192 = vmatprep.subr.mxu0 0.0
    %1193 = vmatpush2.msra.mxu0 0.0
    %1194 = vmatprep.subr.mxu0 0.0
    %1195 = vmatpush2.msra.mxu0 0.0
    %1196 = vmatprep.subr.mxu0 0.0
    %1197 = vmatpush2.msra.mxu0 0.0
    %1198 = vmatprep.subr.mxu0 0.0
    %1199 = vmatpush2.msra.mxu0 0.0
    %1200 = vmatprep.subr.mxu0 0.0
    %1201 = vmatpush2.msra.mxu0 0.0
    %1202 = vmatprep.subr.mxu0 0.0
    %1203 = vmatpush2.msra.mxu0 0.0
    %1204 = vmatprep.subr.mxu0 0.0
    %1205 = vmatpush2.msra.mxu0 0.0
    %1206 = vmatprep.subr.mxu0 0.0
    %1207 = vmatpush2.msra.mxu0 0.0
    %1208 = vmatprep.subr.mxu0 0.0
    %1209 = vmatpush2.msra.mxu0 0.0
    %1210 = vmatprep.subr.mxu0 0.0
    %1211 = vmatpush2.msra.mxu0 0.0
    %1212 = vmatprep.subr.mxu0 0.0
    %1213 = vmatpush2.msra.mxu0 0.0
    %1214 = vmatprep.subr.mxu0 0.0
    %1215 = vmatpush2.msra.mxu0 0.0
    %1216 = vmatprep.subr.mxu0 0.0
    %1217 = vmatpush2.msra.mxu0 0.0
    %1218 = vmatprep.subr.mxu0 0.0
    %1219 = vmatpush2.msra.mxu0 0.0
    %1220 = vmatprep.subr.mxu0 0.0
    %1221 = vmatpush2.msra.mxu0 0.0
    %1222 = vmatprep.mubr.f32.mxu0 0.0
    %1223 = vmatmul.mubr.f32.gmra.mxu0 %v1086
    %v1224 = vpop.f32.mrf.mxu0
    %v1225 = vadd.f32 %v312, %v1224
    %v1226 = vpop.f32.mrf.mxu0
    %v1227 = vadd.f32 %v314, %v1226
    %1228 = vdwg.mxu0
    %v1229 = vxor.u32 %v1154, 2147483648
    %v1230 = vxor.u32 %v1156, 2147483648
    %v1231 = vxor.u32 %v1225, 2147483648
    %v1232 = vmul.f32 %v1229, 1.442695
    %v1233 = vpow.pop %v1232
    %v1234 = vmul.f32 %v1230, 1.442695
    %v1235 = vpow.pop %v1234
    %v1236 = vmul.f32 %v1231, 1.442695
    %v1237 = vpow.pop %v1236
    %v1238 = vadd.f32 %v1233, 1.0
    %v1239 = vadd.f32 %v1235, 1.0
    %v1240 = vadd.f32 %v1237, 1.0
    %v1241 = vrcp.pop %v1238
    %v1242 = vmul.f32 1.0, %v1241
    %v1243 = vrcp.pop %v1239
    %v1244 = vmul.f32 1.0, %v1243
    %v1245 = vrcp.pop %v1240
    %v1246 = vmul.f32 1.0, %v1245
    %v1247 = vtanh.pop %v1227
    %v1248 = vmul.f32 %v1244, %v1084
    %v1249 = vmul.f32 %v1242, %v1247
    %v1250 = vadd.f32 %v1248, %v1249
    %v1251 = vtanh.pop %v1250
    %v1252 = vmul.f32 %v1246, %v1251
    %v1257 = vrot.slane %v235, 2
    %v1258 = vrot.slane %v237, 2
    %v1259 = vrot.slane %v312, 2
    %v1260 = vrot.slane %v314, 2
    %1265 = vmatprep.subr.mxu0 %v377
    %1266 = vmatpush1.msra.mxu0 %v376
    %1267 = vmatprep.subr.mxu0 %v373
    %1268 = vmatpush1.msra.mxu0 %v372
    %1269 = vmatprep.subr.mxu0 %v369
    %1270 = vmatpush1.msra.mxu0 %v368
    %1271 = vmatprep.subr.mxu0 %v365
    %1272 = vmatpush1.msra.mxu0 %v364
    %1273 = vmatprep.subr.mxu0 %v361
    %1274 = vmatpush1.msra.mxu0 %v360
    %1275 = vmatprep.subr.mxu0 %v357
    %1276 = vmatpush1.msra.mxu0 %v356
    %1277 = vmatprep.subr.mxu0 %v353
    %1278 = vmatpush1.msra.mxu0 %v352
    %1279 = vmatprep.subr.mxu0 %v349
    %1280 = vmatpush1.msra.mxu0 %v348
    %1281 = vmatprep.subr.mxu0 %v345
    %1282 = vmatpush1.msra.mxu0 %v344
    %1283 = vmatprep.subr.mxu0 %v341
    %1284 = vmatpush1.msra.mxu0 %v340
    %1285 = vmatprep.subr.mxu0 %v337
    %1286 = vmatpush1.msra.mxu0 %v336
    %1287 = vmatprep.subr.mxu0 %v333
    %1288 = vmatpush1.msra.mxu0 %v332
    %1289 = vmatprep.subr.mxu0 %v329
    %1290 = vmatpush1.msra.mxu0 %v328
    %1291 = vmatprep.subr.mxu0 %v325
    %1292 = vmatpush1.msra.mxu0 %v324
    %1293 = vmatprep.subr.mxu0 %v321
    %1294 = vmatpush1.msra.mxu0 %v320
    %1295 = vmatprep.subr.mxu0 %v317
    %1296 = vmatpush1.msra.mxu0 %v316
    %1297 = vmatprep.subr.mxu0 0.0
    %1298 = vmatpush2.msra.mxu0 0.0
    %1299 = vmatprep.subr.mxu0 0.0
    %1300 = vmatpush2.msra.mxu0 0.0
    %1301 = vmatprep.subr.mxu0 0.0
    %1302 = vmatpush2.msra.mxu0 0.0
    %1303 = vmatprep.subr.mxu0 0.0
    %1304 = vmatpush2.msra.mxu0 0.0
    %1305 = vmatprep.subr.mxu0 0.0
    %1306 = vmatpush2.msra.mxu0 0.0
    %1307 = vmatprep.subr.mxu0 0.0
    %1308 = vmatpush2.msra.mxu0 0.0
    %1309 = vmatprep.subr.mxu0 0.0
    %1310 = vmatpush2.msra.mxu0 0.0
    %1311 = vmatprep.subr.mxu0 0.0
    %1312 = vmatpush2.msra.mxu0 0.0
    %1313 = vmatprep.subr.mxu0 0.0
    %1314 = vmatpush2.msra.mxu0 0.0
    %1315 = vmatprep.subr.mxu0 0.0
    %1316 = vmatpush2.msra.mxu0 0.0
    %1317 = vmatprep.subr.mxu0 0.0
    %1318 = vmatpush2.msra.mxu0 0.0
    %1319 = vmatprep.subr.mxu0 0.0
    %1320 = vmatpush2.msra.mxu0 0.0
    %1321 = vmatprep.subr.mxu0 0.0
    %1322 = vmatpush2.msra.mxu0 0.0
    %1323 = vmatprep.subr.mxu0 0.0
    %1324 = vmatpush2.msra.mxu0 0.0
    %1325 = vmatprep.subr.mxu0 0.0
    %1326 = vmatpush2.msra.mxu0 0.0
    %1327 = vmatprep.subr.mxu0 0.0
    %1328 = vmatpush2.msra.mxu0 0.0
    %1329 = vmatprep.mubr.f32.mxu0 0.0
    %1330 = vmatmul.mubr.f32.gmra.mxu0 %v1252
    %v1331 = vpop.f32.mrf.mxu0
    %v1332 = vadd.f32 %v1257, %v1331
    %v1333 = vpop.f32.mrf.mxu0
    %v1334 = vadd.f32 %v1258, %v1333
    %1335 = vdwg.mxu0
    %1336 = vmatprep.subr.mxu0 %v379
    %1337 = vmatpush1.msra.mxu0 %v378
    %1338 = vmatprep.subr.mxu0 %v375
    %1339 = vmatpush1.msra.mxu0 %v374
    %1340 = vmatprep.subr.mxu0 %v371
    %1341 = vmatpush1.msra.mxu0 %v370
    %1342 = vmatprep.subr.mxu0 %v367
    %1343 = vmatpush1.msra.mxu0 %v366
    %1344 = vmatprep.subr.mxu0 %v363
    %1345 = vmatpush1.msra.mxu0 %v362
    %1346 = vmatprep.subr.mxu0 %v359
    %1347 = vmatpush1.msra.mxu0 %v358
    %1348 = vmatprep.subr.mxu0 %v355
    %1349 = vmatpush1.msra.mxu0 %v354
    %1350 = vmatprep.subr.mxu0 %v351
    %1351 = vmatpush1.msra.mxu0 %v350
    %1352 = vmatprep.subr.mxu0 %v347
    %1353 = vmatpush1.msra.mxu0 %v346
    %1354 = vmatprep.subr.mxu0 %v343
    %1355 = vmatpush1.msra.mxu0 %v342
    %1356 = vmatprep.subr.mxu0 %v339
    %1357 = vmatpush1.msra.mxu0 %v338
    %1358 = vmatprep.subr.mxu0 %v335
    %1359 = vmatpush1.msra.mxu0 %v334
    %1360 = vmatprep.subr.mxu0 %v331
    %1361 = vmatpush1.msra.mxu0 %v330
    %1362 = vmatprep.subr.mxu0 %v327
    %1363 = vmatpush1.msra.mxu0 %v326
    %1364 = vmatprep.subr.mxu0 %v323
    %1365 = vmatpush1.msra.mxu0 %v322
    %1366 = vmatprep.subr.mxu0 %v319
    %1367 = vmatpush1.msra.mxu0 %v318
    %1368 = vmatprep.subr.mxu0 0.0
    %1369 = vmatpush2.msra.mxu0 0.0
    %1370 = vmatprep.subr.mxu0 0.0
    %1371 = vmatpush2.msra.mxu0 0.0
    %1372 = vmatprep.subr.mxu0 0.0
    %1373 = vmatpush2.msra.mxu0 0.0
    %1374 = vmatprep.subr.mxu0 0.0
    %1375 = vmatpush2.msra.mxu0 0.0
    %1376 = vmatprep.subr.mxu0 0.0
    %1377 = vmatpush2.msra.mxu0 0.0
    %1378 = vmatprep.subr.mxu0 0.0
    %1379 = vmatpush2.msra.mxu0 0.0
    %1380 = vmatprep.subr.mxu0 0.0
    %1381 = vmatpush2.msra.mxu0 0.0
    %1382 = vmatprep.subr.mxu0 0.0
    %1383 = vmatpush2.msra.mxu0 0.0
    %1384 = vmatprep.subr.mxu0 0.0
    %1385 = vmatpush2.msra.mxu0 0.0
    %1386 = vmatprep.subr.mxu0 0.0
    %1387 = vmatpush2.msra.mxu0 0.0
    %1388 = vmatprep.subr.mxu0 0.0
    %1389 = vmatpush2.msra.mxu0 0.0
    %1390 = vmatprep.subr.mxu0 0.0
    %1391 = vmatpush2.msra.mxu0 0.0
    %1392 = vmatprep.subr.mxu0 0.0
    %1393 = vmatpush2.msra.mxu0 0.0
    %1394 = vmatprep.subr.mxu0 0.0
    %1395 = vmatpush2.msra.mxu0 0.0
    %1396 = vmatprep.subr.mxu0 0.0
    %1397 = vmatpush2.msra.mxu0 0.0
    %1398 = vmatprep.subr.mxu0 0.0
    %1399 = vmatpush2.msra.mxu0 0.0
    %1400 = vmatprep.mubr.f32.mxu0 0.0
    %1401 = vmatmul.mubr.f32.gmra.mxu0 %v1252
    %v1402 = vpop.f32.mrf.mxu0
    %v1403 = vadd.f32 %v1259, %v1402
    %v1404 = vpop.f32.mrf.mxu0
    %v1405 = vadd.f32 %v1260, %v1404
    %1406 = vdwg.mxu0
    %v1407 = vxor.u32 %v1332, 2147483648
    %v1408 = vxor.u32 %v1334, 2147483648
    %v1409 = vxor.u32 %v1403, 2147483648
    %v1410 = vmul.f32 %v1407, 1.442695
    %v1411 = vpow.pop %v1410
    %v1412 = vmul.f32 %v1408, 1.442695
    %v1413 = vpow.pop %v1412
    %v1414 = vmul.f32 %v1409, 1.442695
    %v1415 = vpow.pop %v1414
    %v1416 = vadd.f32 %v1411, 1.0
    %v1417 = vadd.f32 %v1413, 1.0
    %v1418 = vadd.f32 %v1415, 1.0
    %v1419 = vrcp.pop %v1416
    %v1420 = vmul.f32 1.0, %v1419
    %v1421 = vrcp.pop %v1417
    %v1422 = vmul.f32 1.0, %v1421
    %v1423 = vrcp.pop %v1418
    %v1424 = vmul.f32 1.0, %v1423
    %v1425 = vtanh.pop %v1405
    %v1426 = vmul.f32 %v1422, %v1250
    %v1427 = vmul.f32 %v1420, %v1425
    %v1428 = vadd.f32 %v1426, %v1427
    %v1429 = vtanh.pop %v1428
    %v1430 = vmul.f32 %v1424, %v1429
    %v1431 = vrot.slane %v235, 4
    %v1432 = vrot.slane %v237, 4
    %v1433 = vrot.slane %v312, 4
    %v1434 = vrot.slane %v314, 4
    %1439 = vmatprep.subr.mxu0 %v377
    %1440 = vmatpush1.msra.mxu0 %v376
    %1441 = vmatprep.subr.mxu0 %v373
    %1442 = vmatpush1.msra.mxu0 %v372
    %1443 = vmatprep.subr.mxu0 %v369
    %1444 = vmatpush1.msra.mxu0 %v368
    %1445 = vmatprep.subr.mxu0 %v365
    %1446 = vmatpush1.msra.mxu0 %v364
    %1447 = vmatprep.subr.mxu0 %v361
    %1448 = vmatpush1.msra.mxu0 %v360
    %1449 = vmatprep.subr.mxu0 %v357
    %1450 = vmatpush1.msra.mxu0 %v356
    %1451 = vmatprep.subr.mxu0 %v353
    %1452 = vmatpush1.msra.mxu0 %v352
    %1453 = vmatprep.subr.mxu0 %v349
    %1454 = vmatpush1.msra.mxu0 %v348
    %1455 = vmatprep.subr.mxu0 %v345
    %1456 = vmatpush1.msra.mxu0 %v344
    %1457 = vmatprep.subr.mxu0 %v341
    %1458 = vmatpush1.msra.mxu0 %v340
    %1459 = vmatprep.subr.mxu0 %v337
    %1460 = vmatpush1.msra.mxu0 %v336
    %1461 = vmatprep.subr.mxu0 %v333
    %1462 = vmatpush1.msra.mxu0 %v332
    %1463 = vmatprep.subr.mxu0 %v329
    %1464 = vmatpush1.msra.mxu0 %v328
    %1465 = vmatprep.subr.mxu0 %v325
    %1466 = vmatpush1.msra.mxu0 %v324
    %1467 = vmatprep.subr.mxu0 %v321
    %1468 = vmatpush1.msra.mxu0 %v320
    %1469 = vmatprep.subr.mxu0 %v317
    %1470 = vmatpush1.msra.mxu0 %v316
    %1471 = vmatprep.subr.mxu0 0.0
    %1472 = vmatpush2.msra.mxu0 0.0
    %1473 = vmatprep.subr.mxu0 0.0
    %1474 = vmatpush2.msra.mxu0 0.0
    %1475 = vmatprep.subr.mxu0 0.0
    %1476 = vmatpush2.msra.mxu0 0.0
    %1477 = vmatprep.subr.mxu0 0.0
    %1478 = vmatpush2.msra.mxu0 0.0
    %1479 = vmatprep.subr.mxu0 0.0
    %1480 = vmatpush2.msra.mxu0 0.0
    %1481 = vmatprep.subr.mxu0 0.0
    %1482 = vmatpush2.msra.mxu0 0.0
    %1483 = vmatprep.subr.mxu0 0.0
    %1484 = vmatpush2.msra.mxu0 0.0
    %1485 = vmatprep.subr.mxu0 0.0
    %1486 = vmatpush2.msra.mxu0 0.0
    %1487 = vmatprep.subr.mxu0 0.0
    %1488 = vmatpush2.msra.mxu0 0.0
    %1489 = vmatprep.subr.mxu0 0.0
    %1490 = vmatpush2.msra.mxu0 0.0
    %1491 = vmatprep.subr.mxu0 0.0
    %1492 = vmatpush2.msra.mxu0 0.0
    %1493 = vmatprep.subr.mxu0 0.0
    %1494 = vmatpush2.msra.mxu0 0.0
    %1495 = vmatprep.subr.mxu0 0.0
    %1496 = vmatpush2.msra.mxu0 0.0
    %1497 = vmatprep.subr.mxu0 0.0
    %1498 = vmatpush2.msra.mxu0 0.0
    %1499 = vmatprep.subr.mxu0 0.0
    %1500 = vmatpush2.msra.mxu0 0.0
    %1501 = vmatprep.subr.mxu0 0.0
    %1502 = vmatpush2.msra.mxu0 0.0
    %1503 = vmatprep.mubr.f32.mxu0 0.0
    %1504 = vmatmul.mubr.f32.gmra.mxu0 %v1430
    %v1505 = vpop.f32.mrf.mxu0
    %v1506 = vadd.f32 %v1431, %v1505
    %v1507 = vpop.f32.mrf.mxu0
    %v1508 = vadd.f32 %v1432, %v1507
    %1509 = vdwg.mxu0
    %1510 = vmatprep.subr.mxu0 %v379
    %1511 = vmatpush1.msra.mxu0 %v378
    %1512 = vmatprep.subr.mxu0 %v375
    %1513 = vmatpush1.msra.mxu0 %v374
    %1514 = vmatprep.subr.mxu0 %v371
    %1515 = vmatpush1.msra.mxu0 %v370
    %1516 = vmatprep.subr.mxu0 %v367
    %1517 = vmatpush1.msra.mxu0 %v366
    %1518 = vmatprep.subr.mxu0 %v363
    %1519 = vmatpush1.msra.mxu0 %v362
    %1520 = vmatprep.subr.mxu0 %v359
    %1521 = vmatpush1.msra.mxu0 %v358
    %1522 = vmatprep.subr.mxu0 %v355
    %1523 = vmatpush1.msra.mxu0 %v354
    %1524 = vmatprep.subr.mxu0 %v351
    %1525 = vmatpush1.msra.mxu0 %v350
    %1526 = vmatprep.subr.mxu0 %v347
    %1527 = vmatpush1.msra.mxu0 %v346
    %1528 = vmatprep.subr.mxu0 %v343
    %1529 = vmatpush1.msra.mxu0 %v342
    %1530 = vmatprep.subr.mxu0 %v339
    %1531 = vmatpush1.msra.mxu0 %v338
    %1532 = vmatprep.subr.mxu0 %v335
    %1533 = vmatpush1.msra.mxu0 %v334
    %1534 = vmatprep.subr.mxu0 %v331
    %1535 = vmatpush1.msra.mxu0 %v330
    %1536 = vmatprep.subr.mxu0 %v327
    %1537 = vmatpush1.msra.mxu0 %v326
    %1538 = vmatprep.subr.mxu0 %v323
    %1539 = vmatpush1.msra.mxu0 %v322
    %1540 = vmatprep.subr.mxu0 %v319
    %1541 = vmatpush1.msra.mxu0 %v318
    %1542 = vmatprep.subr.mxu0 0.0
    %1543 = vmatpush2.msra.mxu0 0.0
    %1544 = vmatprep.subr.mxu0 0.0
    %1545 = vmatpush2.msra.mxu0 0.0
    %1546 = vmatprep.subr.mxu0 0.0
    %1547 = vmatpush2.msra.mxu0 0.0
    %1548 = vmatprep.subr.mxu0 0.0
    %1549 = vmatpush2.msra.mxu0 0.0
    %1550 = vmatprep.subr.mxu0 0.0
    %1551 = vmatpush2.msra.mxu0 0.0
    %1552 = vmatprep.subr.mxu0 0.0
    %1553 = vmatpush2.msra.mxu0 0.0
    %1554 = vmatprep.subr.mxu0 0.0
    %1555 = vmatpush2.msra.mxu0 0.0
    %1556 = vmatprep.subr.mxu0 0.0
    %1557 = vmatpush2.msra.mxu0 0.0
    %1558 = vmatprep.subr.mxu0 0.0
    %1559 = vmatpush2.msra.mxu0 0.0
    %1560 = vmatprep.subr.mxu0 0.0
    %1561 = vmatpush2.msra.mxu0 0.0
    %1562 = vmatprep.subr.mxu0 0.0
    %1563 = vmatpush2.msra.mxu0 0.0
    %1564 = vmatprep.subr.mxu0 0.0
    %1565 = vmatpush2.msra.mxu0 0.0
    %1566 = vmatprep.subr.mxu0 0.0
    %1567 = vmatpush2.msra.mxu0 0.0
    %1568 = vmatprep.subr.mxu0 0.0
    %1569 = vmatpush2.msra.mxu0 0.0
    %1570 = vmatprep.subr.mxu0 0.0
    %1571 = vmatpush2.msra.mxu0 0.0
    %1572 = vmatprep.subr.mxu0 0.0
    %1573 = vmatpush2.msra.mxu0 0.0
    %1574 = vmatprep.mubr.f32.mxu0 0.0
    %1575 = vmatmul.mubr.f32.gmra.mxu0 %v1430
    %v1576 = vpop.f32.mrf.mxu0
    %v1577 = vadd.f32 %v1433, %v1576
    %v1578 = vpop.f32.mrf.mxu0
    %v1579 = vadd.f32 %v1434, %v1578
    %1580 = vdwg.mxu0
    %v1581 = vxor.u32 %v1506, 2147483648
    %v1582 = vxor.u32 %v1508, 2147483648
    %v1583 = vxor.u32 %v1577, 2147483648
    %v1584 = vmul.f32 %v1581, 1.442695
    %v1585 = vpow.pop %v1584
    %v1586 = vmul.f32 %v1582, 1.442695
    %v1587 = vpow.pop %v1586
    %v1588 = vmul.f32 %v1583, 1.442695
    %v1589 = vpow.pop %v1588
    %v1590 = vadd.f32 %v1585, 1.0
    %v1591 = vadd.f32 %v1587, 1.0
    %v1592 = vadd.f32 %v1589, 1.0
    %v1593 = vrcp.pop %v1590
    %v1594 = vmul.f32 1.0, %v1593
    %v1595 = vrcp.pop %v1591
    %v1596 = vmul.f32 1.0, %v1595
    %v1597 = vrcp.pop %v1592
    %v1598 = vmul.f32 1.0, %v1597
    %v1599 = vtanh.pop %v1579
    %v1600 = vmul.f32 %v1596, %v1428
    %v1601 = vmul.f32 %v1594, %v1599
    %v1602 = vadd.f32 %v1600, %v1601
    %v1603 = vtanh.pop %v1602
    %v1604 = vmul.f32 %v1598, %v1603
    %v1605 = vrot.slane %v235, 6
    %v1606 = vrot.slane %v237, 6
    %v1607 = vrot.slane %v312, 6
    %v1608 = vrot.slane %v314, 6
    %1613 = vmatprep.subr.mxu0 %v377
    %1614 = vmatpush1.msra.mxu0 %v376
    %1615 = vmatprep.subr.mxu0 %v373
    %1616 = vmatpush1.msra.mxu0 %v372
    %1617 = vmatprep.subr.mxu0 %v369
    %1618 = vmatpush1.msra.mxu0 %v368
    %1619 = vmatprep.subr.mxu0 %v365
    %1620 = vmatpush1.msra.mxu0 %v364
    %1621 = vmatprep.subr.mxu0 %v361
    %1622 = vmatpush1.msra.mxu0 %v360
    %1623 = vmatprep.subr.mxu0 %v357
    %1624 = vmatpush1.msra.mxu0 %v356
    %1625 = vmatprep.subr.mxu0 %v353
    %1626 = vmatpush1.msra.mxu0 %v352
    %1627 = vmatprep.subr.mxu0 %v349
    %1628 = vmatpush1.msra.mxu0 %v348
    %1629 = vmatprep.subr.mxu0 %v345
    %1630 = vmatpush1.msra.mxu0 %v344
    %1631 = vmatprep.subr.mxu0 %v341
    %1632 = vmatpush1.msra.mxu0 %v340
    %1633 = vmatprep.subr.mxu0 %v337
    %1634 = vmatpush1.msra.mxu0 %v336
    %1635 = vmatprep.subr.mxu0 %v333
    %1636 = vmatpush1.msra.mxu0 %v332
    %1637 = vmatprep.subr.mxu0 %v329
    %1638 = vmatpush1.msra.mxu0 %v328
    %1639 = vmatprep.subr.mxu0 %v325
    %1640 = vmatpush1.msra.mxu0 %v324
    %1641 = vmatprep.subr.mxu0 %v321
    %1642 = vmatpush1.msra.mxu0 %v320
    %1643 = vmatprep.subr.mxu0 %v317
    %1644 = vmatpush1.msra.mxu0 %v316
    %1645 = vmatprep.subr.mxu0 0.0
    %1646 = vmatpush2.msra.mxu0 0.0
    %1647 = vmatprep.subr.mxu0 0.0
    %1648 = vmatpush2.msra.mxu0 0.0
    %1649 = vmatprep.subr.mxu0 0.0
    %1650 = vmatpush2.msra.mxu0 0.0
    %1651 = vmatprep.subr.mxu0 0.0
    %1652 = vmatpush2.msra.mxu0 0.0
    %1653 = vmatprep.subr.mxu0 0.0
    %1654 = vmatpush2.msra.mxu0 0.0
    %1655 = vmatprep.subr.mxu0 0.0
    %1656 = vmatpush2.msra.mxu0 0.0
    %1657 = vmatprep.subr.mxu0 0.0
    %1658 = vmatpush2.msra.mxu0 0.0
    %1659 = vmatprep.subr.mxu0 0.0
    %1660 = vmatpush2.msra.mxu0 0.0
    %1661 = vmatprep.subr.mxu0 0.0
    %1662 = vmatpush2.msra.mxu0 0.0
    %1663 = vmatprep.subr.mxu0 0.0
    %1664 = vmatpush2.msra.mxu0 0.0
    %1665 = vmatprep.subr.mxu0 0.0
    %1666 = vmatpush2.msra.mxu0 0.0
    %1667 = vmatprep.subr.mxu0 0.0
    %1668 = vmatpush2.msra.mxu0 0.0
    %1669 = vmatprep.subr.mxu0 0.0
    %1670 = vmatpush2.msra.mxu0 0.0
    %1671 = vmatprep.subr.mxu0 0.0
    %1672 = vmatpush2.msra.mxu0 0.0
    %1673 = vmatprep.subr.mxu0 0.0
    %1674 = vmatpush2.msra.mxu0 0.0
    %1675 = vmatprep.subr.mxu0 0.0
    %1676 = vmatpush2.msra.mxu0 0.0
    %1677 = vmatprep.mubr.f32.mxu0 0.0
    %1678 = vmatmul.mubr.f32.gmra.mxu0 %v1604
    %v1679 = vpop.f32.mrf.mxu0
    %v1680 = vadd.f32 %v1605, %v1679
    %v1681 = vpop.f32.mrf.mxu0
    %v1682 = vadd.f32 %v1606, %v1681
    %1683 = vdwg.mxu0
    %1684 = vmatprep.subr.mxu0 %v379
    %1685 = vmatpush1.msra.mxu0 %v378
    %1686 = vmatprep.subr.mxu0 %v375
    %1687 = vmatpush1.msra.mxu0 %v374
    %1688 = vmatprep.subr.mxu0 %v371
    %1689 = vmatpush1.msra.mxu0 %v370
    %1690 = vmatprep.subr.mxu0 %v367
    %1691 = vmatpush1.msra.mxu0 %v366
    %1692 = vmatprep.subr.mxu0 %v363
    %1693 = vmatpush1.msra.mxu0 %v362
    %1694 = vmatprep.subr.mxu0 %v359
    %1695 = vmatpush1.msra.mxu0 %v358
    %1696 = vmatprep.subr.mxu0 %v355
    %1697 = vmatpush1.msra.mxu0 %v354
    %1698 = vmatprep.subr.mxu0 %v351
    %1699 = vmatpush1.msra.mxu0 %v350
    %1700 = vmatprep.subr.mxu0 %v347
    %1701 = vmatpush1.msra.mxu0 %v346
    %1702 = vmatprep.subr.mxu0 %v343
    %1703 = vmatpush1.msra.mxu0 %v342
    %1704 = vmatprep.subr.mxu0 %v339
    %1705 = vmatpush1.msra.mxu0 %v338
    %1706 = vmatprep.subr.mxu0 %v335
    %1707 = vmatpush1.msra.mxu0 %v334
    %1708 = vmatprep.subr.mxu0 %v331
    %1709 = vmatpush1.msra.mxu0 %v330
    %1710 = vmatprep.subr.mxu0 %v327
    %1711 = vmatpush1.msra.mxu0 %v326
    %1712 = vmatprep.subr.mxu0 %v323
    %1713 = vmatpush1.msra.mxu0 %v322
    %1714 = vmatprep.subr.mxu0 %v319
    %1715 = vmatpush1.msra.mxu0 %v318
    %1716 = vmatprep.subr.mxu0 0.0
    %1717 = vmatpush2.msra.mxu0 0.0
    %1718 = vmatprep.subr.mxu0 0.0
    %1719 = vmatpush2.msra.mxu0 0.0
    %1720 = vmatprep.subr.mxu0 0.0
    %1721 = vmatpush2.msra.mxu0 0.0
    %1722 = vmatprep.subr.mxu0 0.0
    %1723 = vmatpush2.msra.mxu0 0.0
    %1724 = vmatprep.subr.mxu0 0.0
    %1725 = vmatpush2.msra.mxu0 0.0
    %1726 = vmatprep.subr.mxu0 0.0
    %1727 = vmatpush2.msra.mxu0 0.0
    %1728 = vmatprep.subr.mxu0 0.0
    %1729 = vmatpush2.msra.mxu0 0.0
    %1730 = vmatprep.subr.mxu0 0.0
    %1731 = vmatpush2.msra.mxu0 0.0
    %1732 = vmatprep.subr.mxu0 0.0
    %1733 = vmatpush2.msra.mxu0 0.0
    %1734 = vmatprep.subr.mxu0 0.0
    %1735 = vmatpush2.msra.mxu0 0.0
    %1736 = vmatprep.subr.mxu0 0.0
    %1737 = vmatpush2.msra.mxu0 0.0
    %1738 = vmatprep.subr.mxu0 0.0
    %1739 = vmatpush2.msra.mxu0 0.0
    %1740 = vmatprep.subr.mxu0 0.0
    %1741 = vmatpush2.msra.mxu0 0.0
    %1742 = vmatprep.subr.mxu0 0.0
    %1743 = vmatpush2.msra.mxu0 0.0
    %1744 = vmatprep.subr.mxu0 0.0
    %1745 = vmatpush2.msra.mxu0 0.0
    %1746 = vmatprep.subr.mxu0 0.0
    %1747 = vmatpush2.msra.mxu0 0.0
    %1748 = vmatprep.mubr.f32.mxu0 0.0
    %1749 = vmatmul.mubr.f32.gmra.mxu0 %v1604
    %v1750 = vpop.f32.mrf.mxu0
    %v1751 = vadd.f32 %v1607, %v1750
    %v1752 = vpop.f32.mrf.mxu0
    %v1753 = vadd.f32 %v1608, %v1752
    %1754 = vdwg.mxu0
    %v1755 = vxor.u32 %v1680, 2147483648
    %v1756 = vxor.u32 %v1682, 2147483648
    %v1757 = vxor.u32 %v1751, 2147483648
    %v1758 = vmul.f32 %v1755, 1.442695
    %v1759 = vpow.pop %v1758
    %v1760 = vmul.f32 %v1756, 1.442695
    %v1761 = vpow.pop %v1760
    %v1762 = vmul.f32 %v1757, 1.442695
    %v1763 = vpow.pop %v1762
    %v1764 = vadd.f32 %v1759, 1.0
    %v1765 = vadd.f32 %v1761, 1.0
    %v1766 = vadd.f32 %v1763, 1.0
    %v1767 = vrcp.pop %v1764
    %v1768 = vmul.f32 1.0, %v1767
    %v1769 = vrcp.pop %v1765
    %v1770 = vmul.f32 1.0, %v1769
    %v1771 = vrcp.pop %v1766
    %v1772 = vmul.f32 1.0, %v1771
    %v1773 = vtanh.pop %v1753
    %v1774 = vmul.f32 %v1770, %v1602
    %v1775 = vmul.f32 %v1768, %v1773
    %v1776 = vadd.f32 %v1774, %v1775
    %v1777 = vtanh.pop %v1776
    %v1778 = vmul.f32 %v1772, %v1777
    %1779 = vmatprep.subr.mxu0 %v377
    %1780 = vmatpush1.msra.mxu0 %v376
    %1781 = vmatprep.subr.mxu0 %v373
    %1782 = vmatpush1.msra.mxu0 %v372
    %1783 = vmatprep.subr.mxu0 %v369
    %1784 = vmatpush1.msra.mxu0 %v368
    %1785 = vmatprep.subr.mxu0 %v365
    %1786 = vmatpush1.msra.mxu0 %v364
    %1787 = vmatprep.subr.mxu0 %v361
    %1788 = vmatpush1.msra.mxu0 %v360
    %1789 = vmatprep.subr.mxu0 %v357
    %1790 = vmatpush1.msra.mxu0 %v356
    %1791 = vmatprep.subr.mxu0 %v353
    %1792 = vmatpush1.msra.mxu0 %v352
    %1793 = vmatprep.subr.mxu0 %v349
    %1794 = vmatpush1.msra.mxu0 %v348
    %1795 = vmatprep.subr.mxu0 %v345
    %1796 = vmatpush1.msra.mxu0 %v344
    %1797 = vmatprep.subr.mxu0 %v341
    %1798 = vmatpush1.msra.mxu0 %v340
    %1799 = vmatprep.subr.mxu0 %v337
    %1800 = vmatpush1.msra.mxu0 %v336
    %1801 = vmatprep.subr.mxu0 %v333
    %1802 = vmatpush1.msra.mxu0 %v332
    %1803 = vmatprep.subr.mxu0 %v329
    %1804 = vmatpush1.msra.mxu0 %v328
    %1805 = vmatprep.subr.mxu0 %v325
    %1806 = vmatpush1.msra.mxu0 %v324
    %1807 = vmatprep.subr.mxu0 %v321
    %1808 = vmatpush1.msra.mxu0 %v320
    %1809 = vmatprep.subr.mxu0 %v317
    %1810 = vmatpush1.msra.mxu0 %v316
    %1811 = vmatprep.subr.mxu0 0.0
    %1812 = vmatpush2.msra.mxu0 0.0
    %1813 = vmatprep.subr.mxu0 0.0
    %1814 = vmatpush2.msra.mxu0 0.0
    %1815 = vmatprep.subr.mxu0 0.0
    %1816 = vmatpush2.msra.mxu0 0.0
    %1817 = vmatprep.subr.mxu0 0.0
    %1818 = vmatpush2.msra.mxu0 0.0
    %1819 = vmatprep.subr.mxu0 0.0
    %1820 = vmatpush2.msra.mxu0 0.0
    %1821 = vmatprep.subr.mxu0 0.0
    %1822 = vmatpush2.msra.mxu0 0.0
    %1823 = vmatprep.subr.mxu0 0.0
    %1824 = vmatpush2.msra.mxu0 0.0
    %1825 = vmatprep.subr.mxu0 0.0
    %1826 = vmatpush2.msra.mxu0 0.0
    %1827 = vmatprep.subr.mxu0 0.0
    %1828 = vmatpush2.msra.mxu0 0.0
    %1829 = vmatprep.subr.mxu0 0.0
    %1830 = vmatpush2.msra.mxu0 0.0
    %1831 = vmatprep.subr.mxu0 0.0
    %1832 = vmatpush2.msra.mxu0 0.0
    %1833 = vmatprep.subr.mxu0 0.0
    %1834 = vmatpush2.msra.mxu0 0.0
    %1835 = vmatprep.subr.mxu0 0.0
    %1836 = vmatpush2.msra.mxu0 0.0
    %1837 = vmatprep.subr.mxu0 0.0
    %1838 = vmatpush2.msra.mxu0 0.0
    %1839 = vmatprep.subr.mxu0 0.0
    %1840 = vmatpush2.msra.mxu0 0.0
    %1841 = vmatprep.subr.mxu0 0.0
    %1842 = vmatpush2.msra.mxu0 0.0
    %1843 = vmatprep.mubr.f32.mxu0 0.0
    %1844 = vmatmul.mubr.f32.gmra.mxu0 %v1778
    %v1845 = vpop.f32.mrf.mxu0
    %v1846 = vadd.f32 %v229, %v1845
    %v1847 = vpop.f32.mrf.mxu0
    %v1848 = vadd.f32 %v231, %v1847
    %1849 = vdwg.mxu0
    %1850 = vmatprep.subr.mxu0 %v379
    %1851 = vmatpush1.msra.mxu0 %v378
    %1852 = vmatprep.subr.mxu0 %v375
    %1853 = vmatpush1.msra.mxu0 %v374
    %1854 = vmatprep.subr.mxu0 %v371
    %1855 = vmatpush1.msra.mxu0 %v370
    %1856 = vmatprep.subr.mxu0 %v367
    %1857 = vmatpush1.msra.mxu0 %v366
    %1858 = vmatprep.subr.mxu0 %v363
    %1859 = vmatpush1.msra.mxu0 %v362
    %1860 = vmatprep.subr.mxu0 %v359
    %1861 = vmatpush1.msra.mxu0 %v358
    %1862 = vmatprep.subr.mxu0 %v355
    %1863 = vmatpush1.msra.mxu0 %v354
    %1864 = vmatprep.subr.mxu0 %v351
    %1865 = vmatpush1.msra.mxu0 %v350
    %1866 = vmatprep.subr.mxu0 %v347
    %1867 = vmatpush1.msra.mxu0 %v346
    %1868 = vmatprep.subr.mxu0 %v343
    %1869 = vmatpush1.msra.mxu0 %v342
    %1870 = vmatprep.subr.mxu0 %v339
    %1871 = vmatpush1.msra.mxu0 %v338
    %1872 = vmatprep.subr.mxu0 %v335
    %1873 = vmatpush1.msra.mxu0 %v334
    %1874 = vmatprep.subr.mxu0 %v331
    %1875 = vmatpush1.msra.mxu0 %v330
    %1876 = vmatprep.subr.mxu0 %v327
    %1877 = vmatpush1.msra.mxu0 %v326
    %1878 = vmatprep.subr.mxu0 %v323
    %1879 = vmatpush1.msra.mxu0 %v322
    %1880 = vmatprep.subr.mxu0 %v319
    %1881 = vmatpush1.msra.mxu0 %v318
    %1882 = vmatprep.subr.mxu0 0.0
    %1883 = vmatpush2.msra.mxu0 0.0
    %1884 = vmatprep.subr.mxu0 0.0
    %1885 = vmatpush2.msra.mxu0 0.0
    %1886 = vmatprep.subr.mxu0 0.0
    %1887 = vmatpush2.msra.mxu0 0.0
    %1888 = vmatprep.subr.mxu0 0.0
    %1889 = vmatpush2.msra.mxu0 0.0
    %1890 = vmatprep.subr.mxu0 0.0
    %1891 = vmatpush2.msra.mxu0 0.0
    %1892 = vmatprep.subr.mxu0 0.0
    %1893 = vmatpush2.msra.mxu0 0.0
    %1894 = vmatprep.subr.mxu0 0.0
    %1895 = vmatpush2.msra.mxu0 0.0
    %1896 = vmatprep.subr.mxu0 0.0
    %1897 = vmatpush2.msra.mxu0 0.0
    %1898 = vmatprep.subr.mxu0 0.0
    %1899 = vmatpush2.msra.mxu0 0.0
    %1900 = vmatprep.subr.mxu0 0.0
    %1901 = vmatpush2.msra.mxu0 0.0
    %1902 = vmatprep.subr.mxu0 0.0
    %1903 = vmatpush2.msra.mxu0 0.0
    %1904 = vmatprep.subr.mxu0 0.0
    %1905 = vmatpush2.msra.mxu0 0.0
    %1906 = vmatprep.subr.mxu0 0.0
    %1907 = vmatpush2.msra.mxu0 0.0
    %1908 = vmatprep.subr.mxu0 0.0
    %1909 = vmatpush2.msra.mxu0 0.0
    %1910 = vmatprep.subr.mxu0 0.0
    %1911 = vmatpush2.msra.mxu0 0.0
    %1912 = vmatprep.subr.mxu0 0.0
    %1913 = vmatpush2.msra.mxu0 0.0
    %1914 = vmatprep.mubr.f32.mxu0 0.0
    %1915 = vmatmul.mubr.f32.gmra.mxu0 %v1778
    %v1916 = vpop.f32.mrf.mxu0
    %v1917 = vadd.f32 %v306, %v1916
    %v1918 = vpop.f32.mrf.mxu0
    %v1919 = vadd.f32 %v308, %v1918
    %1920 = vdwg.mxu0
    %v1921 = vxor.u32 %v1846, 2147483648
    %v1922 = vxor.u32 %v1848, 2147483648
    %v1923 = vxor.u32 %v1917, 2147483648
    %v1924 = vmul.f32 %v1921, 1.442695
    %v1925 = vpow.pop %v1924
    %v1926 = vmul.f32 %v1922, 1.442695
    %v1927 = vpow.pop %v1926
    %v1928 = vmul.f32 %v1923, 1.442695
    %v1929 = vpow.pop %v1928
    %v1930 = vadd.f32 %v1925, 1.0
    %v1931 = vadd.f32 %v1927, 1.0
    %v1932 = vadd.f32 %v1929, 1.0
    %v1933 = vrcp.pop %v1930
    %v1934 = vmul.f32 1.0, %v1933
    %v1935 = vrcp.pop %v1931
    %v1936 = vmul.f32 1.0, %v1935
    %v1937 = vrcp.pop %v1932
    %v1938 = vmul.f32 1.0, %v1937
    %v1939 = vtanh.pop %v1919
    %v1940 = vmul.f32 %v1936, %v1776
    %v1941 = vmul.f32 %v1934, %v1939
    %v1942 = vadd.f32 %v1940, %v1941
    %v1943 = vtanh.pop %v1942
    %v1944 = vmul.f32 %v1938, %v1943
    %v1945 = vld [vmem:[#allocation10] sm:$0xff]
    %v1946 = vld [vmem:[#allocation10 + $0x8] sm:$0xff]
    %v1947 = vld [vmem:[#allocation10 + $0x10] sm:$0xff]
    %v1948 = vld [vmem:[#allocation10 + $0x18] sm:$0xff]
    %v1949 = vld [vmem:[#allocation10 + $0x20] sm:$0xff]
    %v1950 = vld [vmem:[#allocation10 + $0x28] sm:$0xff]
    %v1951 = vld [vmem:[#allocation10 + $0x30] sm:$0xff]
    %v1952 = vld [vmem:[#allocation10 + $0x38] sm:$0xff]
    %v1953 = vld [vmem:[#allocation10 + $0x40] sm:$0xff]
    %v1954 = vld [vmem:[#allocation10 + $0x48] sm:$0xff]
    %v1955 = vld [vmem:[#allocation10 + $0x50] sm:$0xff]
    %v1956 = vld [vmem:[#allocation10 + $0x58] sm:$0xff]
    %v1957 = vld [vmem:[#allocation10 + $0x60] sm:$0xff]
    %v1958 = vld [vmem:[#allocation10 + $0x68] sm:$0xff]
    %v1959 = vld [vmem:[#allocation10 + $0x70] sm:$0xff]
    %v1960 = vld [vmem:[#allocation10 + $0x78] sm:$0xff]
    %v1961 = vld [vmem:[%s5] sm:$0x1]
    %v1963 = vlaneseq
    %v1964 = vshrl.u32 %v1963, 7
    %v1965 = vsub.s32 0, %v1964
    %v1966 = vrot.slane %v1961, %v1965
    %1968 = vmatprep.subr.mxu0 0.0
    %1969 = vmatpush1.msra.mxu0 %v1960
    %1970 = vmatprep.subr.mxu0 0.0
    %1971 = vmatpush1.msra.mxu0 %v1959
    %1972 = vmatprep.subr.mxu0 0.0
    %1973 = vmatpush1.msra.mxu0 %v1958
    %1974 = vmatprep.subr.mxu0 0.0
    %1975 = vmatpush1.msra.mxu0 %v1957
    %1976 = vmatprep.subr.mxu0 0.0
    %1977 = vmatpush1.msra.mxu0 %v1956
    %1978 = vmatprep.subr.mxu0 0.0
    %1979 = vmatpush1.msra.mxu0 %v1955
    %1980 = vmatprep.subr.mxu0 0.0
    %1981 = vmatpush1.msra.mxu0 %v1954
    %1982 = vmatprep.subr.mxu0 0.0
    %1983 = vmatpush1.msra.mxu0 %v1953
    %1984 = vmatprep.subr.mxu0 0.0
    %1985 = vmatpush1.msra.mxu0 %v1952
    %1986 = vmatprep.subr.mxu0 0.0
    %1987 = vmatpush1.msra.mxu0 %v1951
    %1988 = vmatprep.subr.mxu0 0.0
    %1989 = vmatpush1.msra.mxu0 %v1950
    %1990 = vmatprep.subr.mxu0 0.0
    %1991 = vmatpush1.msra.mxu0 %v1949
    %1992 = vmatprep.subr.mxu0 0.0
    %1993 = vmatpush1.msra.mxu0 %v1948
    %1994 = vmatprep.subr.mxu0 0.0
    %1995 = vmatpush1.msra.mxu0 %v1947
    %1996 = vmatprep.subr.mxu0 0.0
    %1997 = vmatpush1.msra.mxu0 %v1946
    %1998 = vmatprep.subr.mxu0 0.0
    %1999 = vmatpush1.msra.mxu0 %v1945
    %2000 = vmatprep.subr.mxu0 0.0
    %2001 = vmatpush2.msra.mxu0 0.0
    %2002 = vmatprep.subr.mxu0 0.0
    %2003 = vmatpush2.msra.mxu0 0.0
    %2004 = vmatprep.subr.mxu0 0.0
    %2005 = vmatpush2.msra.mxu0 0.0
    %2006 = vmatprep.subr.mxu0 0.0
    %2007 = vmatpush2.msra.mxu0 0.0
    %2008 = vmatprep.subr.mxu0 0.0
    %2009 = vmatpush2.msra.mxu0 0.0
    %2010 = vmatprep.subr.mxu0 0.0
    %2011 = vmatpush2.msra.mxu0 0.0
    %2012 = vmatprep.subr.mxu0 0.0
    %2013 = vmatpush2.msra.mxu0 0.0
    %2014 = vmatprep.subr.mxu0 0.0
    %2015 = vmatpush2.msra.mxu0 0.0
    %2016 = vmatprep.subr.mxu0 0.0
    %2017 = vmatpush2.msra.mxu0 0.0
    %2018 = vmatprep.subr.mxu0 0.0
    %2019 = vmatpush2.msra.mxu0 0.0
    %2020 = vmatprep.subr.mxu0 0.0
    %2021 = vmatpush2.msra.mxu0 0.0
    %2022 = vmatprep.subr.mxu0 0.0
    %2023 = vmatpush2.msra.mxu0 0.0
    %2024 = vmatprep.subr.mxu0 0.0
    %2025 = vmatpush2.msra.mxu0 0.0
    %2026 = vmatprep.subr.mxu0 0.0
    %2027 = vmatpush2.msra.mxu0 0.0
    %2028 = vmatprep.subr.mxu0 0.0
    %2029 = vmatpush2.msra.mxu0 0.0
    %2030 = vmatprep.subr.mxu0 0.0
    %2031 = vmatpush2.msra.mxu0 0.0
    %2032 = vmatprep.mubr.f32.mxu0 0.0
    %2033 = vmatmul.mubr.f32.gmra.mxu0 %v1944
    %v2034 = vpop.f32.mrf.mxu0
    %v2035 = vadd.f32 %v1966, %v2034
    %v2036 = vpop.f32.mrf.mxu0
    %2037 = vdwg.mxu0
    %2038 = vst [vmem:[#allocation11] sm:$0x3] %v2035
    // Predicated region
    $region58: #{tpu_custom_call.1} parent=1 // pred_check
      _
    $region59: #{tpu_custom_call.1} parent=1 // pred_check_branch
      %2040 = sbr.rel (0) target = $region61
    $region60: #{tpu_custom_call.1} parent=1 // pred_region
      %s2042 = ssub.s32 32, 32
      %2043 = vsyncadd [#allocation4], %s2042
      %s2045 = sshll.u32 [#allocation11], 4
      %s2046 = int_to_ptr.vmem [resolvable:$true] %s2045
      %2048 = dma.vmem_to_hbm [thread:$0]  %s2046, 32, %s9, [#allocation4]
    $region61: #{tpu_custom_call.1} parent=1 // pred_fallthru
      _
    // Predicated region
    $region62: #{tpu_custom_call.1} parent=1 // pred_check
      _
    $region63: #{tpu_custom_call.1} parent=1 // pred_check_branch
      %2050 = sbr.rel (0) target = $region65
    $region64: #{tpu_custom_call.1} parent=1 // pred_region
      %2051 = dma.done [#allocation4], 32
    $region65: #{tpu_custom_call.1} parent=1 // pred_fallthru
      _
    %2052 = vsyncpa [#allocation3], 1
    %2053 = vsyncpa [#allocation6], 1
    %2054 = vsyncpa [#allocation9], 1
    %2055 = vsyncpa [#allocation4], 1

</llo_original>
